<compile_context>
chip_gen: v5e
topology: v5e:2x2
jax: 0.10.0
libtpu: 0.0.40
codegen_flags: <defaults>
</compile_context>

<pallas_src>
import functools

import jax
import jax.numpy as jnp
from jax import lax
from jax.experimental import pallas as pl
from jax.experimental.pallas import tpu as pltpu


def _conv_stage(x, w_ref, b_ref, width, relu):
    """One 3x3 valid conv on a lane-flattened image.

    x:     (C_in, L_in) f32 value, row-major flat image with row stride `width`.
    w_ref: (9, C_out, C_in) VMEM ref, tap-major (t = kh*3 + kw).
    b_ref: (C_out, 1) VMEM ref.
    Returns (C_out, L_in - 2*width - 2); output pixel (i, j) sits at i*width + j.
    """
    c_in, l_in = x.shape
    l_out = l_in - (2 * width + 2)
    acc = None
    for kh in range(3):
        for kw in range(3):
            t = kh * 3 + kw
            s = kh * width + kw
            # MXU matmul over channels on a lane-dense slab.
            contrib = jnp.dot(w_ref[t], x[:, s:s + l_out],
                              preferred_element_type=jnp.float32)
            acc = contrib if acc is None else acc + contrib
    y = acc + b_ref[...]          # single lane-broadcast bias add per stage
    if relu:
        y = jnp.maximum(y, 0.0)
    return y


def _fused_b_kernel(x_ref, w1, b1, w2, b2, w3, b3, w4, b4, o_ref, *, width):
    # x_ref: (1, C, H*W) VMEM block; o_ref: (1, C, L_final) VMEM block.
    x = x_ref[0]                                    # (C, H*W), lane-dense
    x = _conv_stage(x, w1, b1, width, relu=False)   # self.a[0]
    x = _conv_stage(x, w2, b2, width, relu=False)   # self.a[1]
    x = _conv_stage(x, w3, b3, width, relu=True)    # self.a[2] + self.b (ReLU)
    x = _conv_stage(x, w4, b4, width, relu=False)   # self.c
    o_ref[0] = x                                    # single lane-dense store


def module_b_forward(x, params):
    """x: (N, C, H, W) f32; params: 4 x (weight (C_out, C_in, 3, 3), bias (C_out,))."""
    n, c_in, h, w = x.shape
    c_out = params[-1][0].shape[0]
    n_stages = len(params)
    h_out, w_out = h - 2 * n_stages, w - 2 * n_stages
    l_in = h * w
    l_final = l_in - n_stages * (2 * w + 2)

    # Lane-dense layout: flatten H*W into the last (lane) dimension up front.
    x_flat = x.reshape(n, c_in, l_in).astype(jnp.float32)

    args = [x_flat]
    in_specs = [pl.BlockSpec((1, c_in, l_in), lambda i: (i, 0, 0))]
    for wt, bs in params:
        co, ci = wt.shape[0], wt.shape[1]
        # Tap-major weights: w_taps[kh*3 + kw, o, i] = wt[o, i, kh, kw].
        w_taps = jnp.transpose(wt, (2, 3, 0, 1)).reshape(9, co, ci)
        args += [w_taps.astype(jnp.float32),
                 bs.reshape(co, 1).astype(jnp.float32)]
        in_specs += [pl.BlockSpec((9, co, ci), lambda i: (0, 0, 0)),
                     pl.BlockSpec((co, 1), lambda i: (0, 0))]

    kernel = functools.partial(_fused_b_kernel, width=w)
    out_flat = pl.pallas_call(
        kernel,
        out_shape=jax.ShapeDtypeStruct((n, c_out, l_final), jnp.float32),
        grid=(n,),
        in_specs=in_specs,
        out_specs=pl.BlockSpec((1, c_out, l_final), lambda i: (i, 0, 0)),
        compiler_params=pltpu.CompilerParams(
            dimension_semantics=("parallel",)),   # batch across TCs on v7x
    )(*args)

    # Un-flatten in XLA: valid output pixel (i, j) sits at flat index i*w + j.
    pad = h_out * w - l_final                     # = 8 for 4 stages of 3x3
    out = jnp.pad(out_flat, ((0, 0), (0, 0), (0, pad)))
    return out.reshape(n, c_out, h_out, w)[..., :w_out]


def _ref_forward(x, params):
    # Pure-JAX reference for correctness checking.
    def conv(x, w, b, relu=False):
        y = lax.conv_general_dilated(
            x, w, window_strides=(1, 1), padding="VALID",
            dimension_numbers=("NCHW", "OIHW", "NCHW"))
        y = y + b[None, :, None, None]
        return jnp.maximum(y, 0.0) if relu else y
    (w1, b1), (w2, b2), (w3, b3), (w4, b4) = params
    x = conv(x, w1, b1)
    x = conv(x, w2, b2)
    x = conv(x, w3, b3, relu=True)
    x = conv(x, w4, b4)
    return x


def make_params(key):
    params = []
    for _ in range(4):
        kw_, kb_, key = jax.random.split(key, 3)
        # Conv2d(3, 3, 3): weight (3, 3, 3, 3) OIHW, bias (3,)
        fan_in = 3 * 3 * 3
        bound = 1.0 / (fan_in ** 0.5)
        wt = jax.random.uniform(kw_, (3, 3, 3, 3), jnp.float32, -bound, bound)
        bs = jax.random.uniform(kb_, (3,), jnp.float32, -bound, bound)
        params.append((wt, bs))
    return params


if __name__ == "__main__":
    key = jax.random.PRNGKey(0)
    kx, kp = jax.random.split(key)
    x = jax.random.normal(kx, (2, 3, 16, 16), jnp.float32)  # N=2, C=3, H=W=16
    params = make_params(kp)

    out = jax.block_until_ready(module_b_forward(x, params))
    ref = _ref_forward(x, params)

    assert out.shape == (2, 3, 8, 8), out.shape
    max_err = float(jnp.max(jnp.abs(out - ref)))
    assert jnp.allclose(out, ref, atol=1e-3, rtol=1e-3), max_err
    print("KERNEL_OK")
</pallas_src>

<mosaic_0001>
module attributes {stable_mosaic.version = 11 : i64} {
  func.func @_fused_b_kernel(%arg0: i32, %arg1: memref<1x3x256xf32, #tpu.memory_space<vmem>>, %arg2: memref<9x3x3xf32, #tpu.memory_space<vmem>>, %arg3: memref<3x1xf32, #tpu.memory_space<vmem>>, %arg4: memref<9x3x3xf32, #tpu.memory_space<vmem>>, %arg5: memref<3x1xf32, #tpu.memory_space<vmem>>, %arg6: memref<9x3x3xf32, #tpu.memory_space<vmem>>, %arg7: memref<3x1xf32, #tpu.memory_space<vmem>>, %arg8: memref<9x3x3xf32, #tpu.memory_space<vmem>>, %arg9: memref<3x1xf32, #tpu.memory_space<vmem>>, %arg10: memref<1x3x120xf32, #tpu.memory_space<vmem>>) attributes {dimension_semantics = [#tpu.dimension_semantics<parallel>], iteration_bounds = array<i64: 2>, scalar_prefetch = 0 : i64, scratch_operands = 0 : i64, tpu.core_type = #tpu.core_type<tc>, window_params = [{transform_indices = @transform_0, window_bounds = array<i64: 1, 3, 256>}, {pipeline_mode = #tpu.pipeline_mode<synchronous>, transform_indices = @transform_1, window_bounds = array<i64: 9, 3, 3>}, {pipeline_mode = #tpu.pipeline_mode<synchronous>, transform_indices = @transform_2, window_bounds = array<i64: 3, 1>}, {pipeline_mode = #tpu.pipeline_mode<synchronous>, transform_indices = @transform_3, window_bounds = array<i64: 9, 3, 3>}, {pipeline_mode = #tpu.pipeline_mode<synchronous>, transform_indices = @transform_4, window_bounds = array<i64: 3, 1>}, {pipeline_mode = #tpu.pipeline_mode<synchronous>, transform_indices = @transform_5, window_bounds = array<i64: 9, 3, 3>}, {pipeline_mode = #tpu.pipeline_mode<synchronous>, transform_indices = @transform_6, window_bounds = array<i64: 3, 1>}, {pipeline_mode = #tpu.pipeline_mode<synchronous>, transform_indices = @transform_7, window_bounds = array<i64: 9, 3, 3>}, {pipeline_mode = #tpu.pipeline_mode<synchronous>, transform_indices = @transform_8, window_bounds = array<i64: 3, 1>}, {transform_indices = @transform_9, window_bounds = array<i64: 1, 3, 120>}]} {
    %c0 = arith.constant 0 : index
    %c0_0 = arith.constant 0 : index
    %c0_1 = arith.constant 0 : index
    %0 = vector.load %arg1[%c0, %c0_0, %c0_1] : memref<1x3x256xf32, #tpu.memory_space<vmem>>, vector<1x3x256xf32>
    %1 = vector.shape_cast %0 : vector<1x3x256xf32> to vector<3x256xf32>
    %c0_2 = arith.constant 0 : index
    %c0_3 = arith.constant 0 : index
    %c0_4 = arith.constant 0 : index
    %2 = vector.load %arg2[%c0_2, %c0_3, %c0_4] : memref<9x3x3xf32, #tpu.memory_space<vmem>>, vector<1x3x3xf32>
    %3 = vector.shape_cast %2 : vector<1x3x3xf32> to vector<3x3xf32>
    %4 = vector.extract_strided_slice %1 {offsets = [0, 0], sizes = [3, 222], strides = [1, 1]} : vector<3x256xf32> to vector<3x222xf32>
    %cst = arith.constant dense<0.000000e+00> : vector<3x222xf32>
    %5 = tpu.matmul %3, %4, %cst {dimension_numbers = #tpu.dot_dimension_numbers<[1], [0], [0], [1], [0, 0, 1, 1], [], []>} : vector<3x3xf32>, vector<3x222xf32>, vector<3x222xf32> -> vector<3x222xf32>
    %c1 = arith.constant 1 : index
    %c0_5 = arith.constant 0 : index
    %c0_6 = arith.constant 0 : index
    %6 = vector.load %arg2[%c1, %c0_5, %c0_6] : memref<9x3x3xf32, #tpu.memory_space<vmem>>, vector<1x3x3xf32>
    %7 = vector.shape_cast %6 : vector<1x3x3xf32> to vector<3x3xf32>
    %8 = vector.extract_strided_slice %1 {offsets = [0, 1], sizes = [3, 222], strides = [1, 1]} : vector<3x256xf32> to vector<3x222xf32>
    %cst_7 = arith.constant dense<0.000000e+00> : vector<3x222xf32>
    %9 = tpu.matmul %7, %8, %cst_7 {dimension_numbers = #tpu.dot_dimension_numbers<[1], [0], [0], [1], [0, 0, 1, 1], [], []>} : vector<3x3xf32>, vector<3x222xf32>, vector<3x222xf32> -> vector<3x222xf32>
    %10 = arith.addf %5, %9 : vector<3x222xf32>
    %c2 = arith.constant 2 : index
    %c0_8 = arith.constant 0 : index
    %c0_9 = arith.constant 0 : index
    %11 = vector.load %arg2[%c2, %c0_8, %c0_9] : memref<9x3x3xf32, #tpu.memory_space<vmem>>, vector<1x3x3xf32>
    %12 = vector.shape_cast %11 : vector<1x3x3xf32> to vector<3x3xf32>
    %13 = vector.extract_strided_slice %1 {offsets = [0, 2], sizes = [3, 222], strides = [1, 1]} : vector<3x256xf32> to vector<3x222xf32>
    %cst_10 = arith.constant dense<0.000000e+00> : vector<3x222xf32>
    %14 = tpu.matmul %12, %13, %cst_10 {dimension_numbers = #tpu.dot_dimension_numbers<[1], [0], [0], [1], [0, 0, 1, 1], [], []>} : vector<3x3xf32>, vector<3x222xf32>, vector<3x222xf32> -> vector<3x222xf32>
    %15 = arith.addf %10, %14 : vector<3x222xf32>
    %c3 = arith.constant 3 : index
    %c0_11 = arith.constant 0 : index
    %c0_12 = arith.constant 0 : index
    %16 = vector.load %arg2[%c3, %c0_11, %c0_12] : memref<9x3x3xf32, #tpu.memory_space<vmem>>, vector<1x3x3xf32>
    %17 = vector.shape_cast %16 : vector<1x3x3xf32> to vector<3x3xf32>
    %18 = vector.extract_strided_slice %1 {offsets = [0, 16], sizes = [3, 222], strides = [1, 1]} : vector<3x256xf32> to vector<3x222xf32>
    %cst_13 = arith.constant dense<0.000000e+00> : vector<3x222xf32>
    %19 = tpu.matmul %17, %18, %cst_13 {dimension_numbers = #tpu.dot_dimension_numbers<[1], [0], [0], [1], [0, 0, 1, 1], [], []>} : vector<3x3xf32>, vector<3x222xf32>, vector<3x222xf32> -> vector<3x222xf32>
    %20 = arith.addf %15, %19 : vector<3x222xf32>
    %c4 = arith.constant 4 : index
    %c0_14 = arith.constant 0 : index
    %c0_15 = arith.constant 0 : index
    %21 = vector.load %arg2[%c4, %c0_14, %c0_15] : memref<9x3x3xf32, #tpu.memory_space<vmem>>, vector<1x3x3xf32>
    %22 = vector.shape_cast %21 : vector<1x3x3xf32> to vector<3x3xf32>
    %23 = vector.extract_strided_slice %1 {offsets = [0, 17], sizes = [3, 222], strides = [1, 1]} : vector<3x256xf32> to vector<3x222xf32>
    %cst_16 = arith.constant dense<0.000000e+00> : vector<3x222xf32>
    %24 = tpu.matmul %22, %23, %cst_16 {dimension_numbers = #tpu.dot_dimension_numbers<[1], [0], [0], [1], [0, 0, 1, 1], [], []>} : vector<3x3xf32>, vector<3x222xf32>, vector<3x222xf32> -> vector<3x222xf32>
    %25 = arith.addf %20, %24 : vector<3x222xf32>
    %c5 = arith.constant 5 : index
    %c0_17 = arith.constant 0 : index
    %c0_18 = arith.constant 0 : index
    %26 = vector.load %arg2[%c5, %c0_17, %c0_18] : memref<9x3x3xf32, #tpu.memory_space<vmem>>, vector<1x3x3xf32>
    %27 = vector.shape_cast %26 : vector<1x3x3xf32> to vector<3x3xf32>
    %28 = vector.extract_strided_slice %1 {offsets = [0, 18], sizes = [3, 222], strides = [1, 1]} : vector<3x256xf32> to vector<3x222xf32>
    %cst_19 = arith.constant dense<0.000000e+00> : vector<3x222xf32>
    %29 = tpu.matmul %27, %28, %cst_19 {dimension_numbers = #tpu.dot_dimension_numbers<[1], [0], [0], [1], [0, 0, 1, 1], [], []>} : vector<3x3xf32>, vector<3x222xf32>, vector<3x222xf32> -> vector<3x222xf32>
    %30 = arith.addf %25, %29 : vector<3x222xf32>
    %c6 = arith.constant 6 : index
    %c0_20 = arith.constant 0 : index
    %c0_21 = arith.constant 0 : index
    %31 = vector.load %arg2[%c6, %c0_20, %c0_21] : memref<9x3x3xf32, #tpu.memory_space<vmem>>, vector<1x3x3xf32>
    %32 = vector.shape_cast %31 : vector<1x3x3xf32> to vector<3x3xf32>
    %33 = vector.extract_strided_slice %1 {offsets = [0, 32], sizes = [3, 222], strides = [1, 1]} : vector<3x256xf32> to vector<3x222xf32>
    %cst_22 = arith.constant dense<0.000000e+00> : vector<3x222xf32>
    %34 = tpu.matmul %32, %33, %cst_22 {dimension_numbers = #tpu.dot_dimension_numbers<[1], [0], [0], [1], [0, 0, 1, 1], [], []>} : vector<3x3xf32>, vector<3x222xf32>, vector<3x222xf32> -> vector<3x222xf32>
    %35 = arith.addf %30, %34 : vector<3x222xf32>
    %c7 = arith.constant 7 : index
    %c0_23 = arith.constant 0 : index
    %c0_24 = arith.constant 0 : index
    %36 = vector.load %arg2[%c7, %c0_23, %c0_24] : memref<9x3x3xf32, #tpu.memory_space<vmem>>, vector<1x3x3xf32>
    %37 = vector.shape_cast %36 : vector<1x3x3xf32> to vector<3x3xf32>
    %38 = vector.extract_strided_slice %1 {offsets = [0, 33], sizes = [3, 222], strides = [1, 1]} : vector<3x256xf32> to vector<3x222xf32>
    %cst_25 = arith.constant dense<0.000000e+00> : vector<3x222xf32>
    %39 = tpu.matmul %37, %38, %cst_25 {dimension_numbers = #tpu.dot_dimension_numbers<[1], [0], [0], [1], [0, 0, 1, 1], [], []>} : vector<3x3xf32>, vector<3x222xf32>, vector<3x222xf32> -> vector<3x222xf32>
    %40 = arith.addf %35, %39 : vector<3x222xf32>
    %c8 = arith.constant 8 : index
    %c0_26 = arith.constant 0 : index
    %c0_27 = arith.constant 0 : index
    %41 = vector.load %arg2[%c8, %c0_26, %c0_27] : memref<9x3x3xf32, #tpu.memory_space<vmem>>, vector<1x3x3xf32>
    %42 = vector.shape_cast %41 : vector<1x3x3xf32> to vector<3x3xf32>
    %43 = vector.extract_strided_slice %1 {offsets = [0, 34], sizes = [3, 222], strides = [1, 1]} : vector<3x256xf32> to vector<3x222xf32>
    %cst_28 = arith.constant dense<0.000000e+00> : vector<3x222xf32>
    %44 = tpu.matmul %42, %43, %cst_28 {dimension_numbers = #tpu.dot_dimension_numbers<[1], [0], [0], [1], [0, 0, 1, 1], [], []>} : vector<3x3xf32>, vector<3x222xf32>, vector<3x222xf32> -> vector<3x222xf32>
    %45 = arith.addf %40, %44 : vector<3x222xf32>
    %c0_29 = arith.constant 0 : index
    %c0_30 = arith.constant 0 : index
    %46 = vector.load %arg3[%c0_29, %c0_30] : memref<3x1xf32, #tpu.memory_space<vmem>>, vector<3x1xf32>
    %47 = vector.broadcast %46 : vector<3x1xf32> to vector<3x222xf32>
    %48 = arith.addf %45, %47 : vector<3x222xf32>
    %c0_31 = arith.constant 0 : index
    %c0_32 = arith.constant 0 : index
    %c0_33 = arith.constant 0 : index
    %49 = vector.load %arg4[%c0_31, %c0_32, %c0_33] : memref<9x3x3xf32, #tpu.memory_space<vmem>>, vector<1x3x3xf32>
    %50 = vector.shape_cast %49 : vector<1x3x3xf32> to vector<3x3xf32>
    %51 = vector.extract_strided_slice %48 {offsets = [0, 0], sizes = [3, 188], strides = [1, 1]} : vector<3x222xf32> to vector<3x188xf32>
    %cst_34 = arith.constant dense<0.000000e+00> : vector<3x188xf32>
    %52 = tpu.matmul %50, %51, %cst_34 {dimension_numbers = #tpu.dot_dimension_numbers<[1], [0], [0], [1], [0, 0, 1, 1], [], []>} : vector<3x3xf32>, vector<3x188xf32>, vector<3x188xf32> -> vector<3x188xf32>
    %c1_35 = arith.constant 1 : index
    %c0_36 = arith.constant 0 : index
    %c0_37 = arith.constant 0 : index
    %53 = vector.load %arg4[%c1_35, %c0_36, %c0_37] : memref<9x3x3xf32, #tpu.memory_space<vmem>>, vector<1x3x3xf32>
    %54 = vector.shape_cast %53 : vector<1x3x3xf32> to vector<3x3xf32>
    %55 = vector.extract_strided_slice %48 {offsets = [0, 1], sizes = [3, 188], strides = [1, 1]} : vector<3x222xf32> to vector<3x188xf32>
    %cst_38 = arith.constant dense<0.000000e+00> : vector<3x188xf32>
    %56 = tpu.matmul %54, %55, %cst_38 {dimension_numbers = #tpu.dot_dimension_numbers<[1], [0], [0], [1], [0, 0, 1, 1], [], []>} : vector<3x3xf32>, vector<3x188xf32>, vector<3x188xf32> -> vector<3x188xf32>
    %57 = arith.addf %52, %56 : vector<3x188xf32>
    %c2_39 = arith.constant 2 : index
    %c0_40 = arith.constant 0 : index
    %c0_41 = arith.constant 0 : index
    %58 = vector.load %arg4[%c2_39, %c0_40, %c0_41] : memref<9x3x3xf32, #tpu.memory_space<vmem>>, vector<1x3x3xf32>
    %59 = vector.shape_cast %58 : vector<1x3x3xf32> to vector<3x3xf32>
    %60 = vector.extract_strided_slice %48 {offsets = [0, 2], sizes = [3, 188], strides = [1, 1]} : vector<3x222xf32> to vector<3x188xf32>
    %cst_42 = arith.constant dense<0.000000e+00> : vector<3x188xf32>
    %61 = tpu.matmul %59, %60, %cst_42 {dimension_numbers = #tpu.dot_dimension_numbers<[1], [0], [0], [1], [0, 0, 1, 1], [], []>} : vector<3x3xf32>, vector<3x188xf32>, vector<3x188xf32> -> vector<3x188xf32>
    %62 = arith.addf %57, %61 : vector<3x188xf32>
    %c3_43 = arith.constant 3 : index
    %c0_44 = arith.constant 0 : index
    %c0_45 = arith.constant 0 : index
    %63 = vector.load %arg4[%c3_43, %c0_44, %c0_45] : memref<9x3x3xf32, #tpu.memory_space<vmem>>, vector<1x3x3xf32>
    %64 = vector.shape_cast %63 : vector<1x3x3xf32> to vector<3x3xf32>
    %65 = vector.extract_strided_slice %48 {offsets = [0, 16], sizes = [3, 188], strides = [1, 1]} : vector<3x222xf32> to vector<3x188xf32>
    %cst_46 = arith.constant dense<0.000000e+00> : vector<3x188xf32>
    %66 = tpu.matmul %64, %65, %cst_46 {dimension_numbers = #tpu.dot_dimension_numbers<[1], [0], [0], [1], [0, 0, 1, 1], [], []>} : vector<3x3xf32>, vector<3x188xf32>, vector<3x188xf32> -> vector<3x188xf32>
    %67 = arith.addf %62, %66 : vector<3x188xf32>
    %c4_47 = arith.constant 4 : index
    %c0_48 = arith.constant 0 : index
    %c0_49 = arith.constant 0 : index
    %68 = vector.load %arg4[%c4_47, %c0_48, %c0_49] : memref<9x3x3xf32, #tpu.memory_space<vmem>>, vector<1x3x3xf32>
    %69 = vector.shape_cast %68 : vector<1x3x3xf32> to vector<3x3xf32>
    %70 = vector.extract_strided_slice %48 {offsets = [0, 17], sizes = [3, 188], strides = [1, 1]} : vector<3x222xf32> to vector<3x188xf32>
    %cst_50 = arith.constant dense<0.000000e+00> : vector<3x188xf32>
    %71 = tpu.matmul %69, %70, %cst_50 {dimension_numbers = #tpu.dot_dimension_numbers<[1], [0], [0], [1], [0, 0, 1, 1], [], []>} : vector<3x3xf32>, vector<3x188xf32>, vector<3x188xf32> -> vector<3x188xf32>
    %72 = arith.addf %67, %71 : vector<3x188xf32>
    %c5_51 = arith.constant 5 : index
    %c0_52 = arith.constant 0 : index
    %c0_53 = arith.constant 0 : index
    %73 = vector.load %arg4[%c5_51, %c0_52, %c0_53] : memref<9x3x3xf32, #tpu.memory_space<vmem>>, vector<1x3x3xf32>
    %74 = vector.shape_cast %73 : vector<1x3x3xf32> to vector<3x3xf32>
    %75 = vector.extract_strided_slice %48 {offsets = [0, 18], sizes = [3, 188], strides = [1, 1]} : vector<3x222xf32> to vector<3x188xf32>
    %cst_54 = arith.constant dense<0.000000e+00> : vector<3x188xf32>
    %76 = tpu.matmul %74, %75, %cst_54 {dimension_numbers = #tpu.dot_dimension_numbers<[1], [0], [0], [1], [0, 0, 1, 1], [], []>} : vector<3x3xf32>, vector<3x188xf32>, vector<3x188xf32> -> vector<3x188xf32>
    %77 = arith.addf %72, %76 : vector<3x188xf32>
    %c6_55 = arith.constant 6 : index
    %c0_56 = arith.constant 0 : index
    %c0_57 = arith.constant 0 : index
    %78 = vector.load %arg4[%c6_55, %c0_56, %c0_57] : memref<9x3x3xf32, #tpu.memory_space<vmem>>, vector<1x3x3xf32>
    %79 = vector.shape_cast %78 : vector<1x3x3xf32> to vector<3x3xf32>
    %80 = vector.extract_strided_slice %48 {offsets = [0, 32], sizes = [3, 188], strides = [1, 1]} : vector<3x222xf32> to vector<3x188xf32>
    %cst_58 = arith.constant dense<0.000000e+00> : vector<3x188xf32>
    %81 = tpu.matmul %79, %80, %cst_58 {dimension_numbers = #tpu.dot_dimension_numbers<[1], [0], [0], [1], [0, 0, 1, 1], [], []>} : vector<3x3xf32>, vector<3x188xf32>, vector<3x188xf32> -> vector<3x188xf32>
    %82 = arith.addf %77, %81 : vector<3x188xf32>
    %c7_59 = arith.constant 7 : index
    %c0_60 = arith.constant 0 : index
    %c0_61 = arith.constant 0 : index
    %83 = vector.load %arg4[%c7_59, %c0_60, %c0_61] : memref<9x3x3xf32, #tpu.memory_space<vmem>>, vector<1x3x3xf32>
    %84 = vector.shape_cast %83 : vector<1x3x3xf32> to vector<3x3xf32>
    %85 = vector.extract_strided_slice %48 {offsets = [0, 33], sizes = [3, 188], strides = [1, 1]} : vector<3x222xf32> to vector<3x188xf32>
    %cst_62 = arith.constant dense<0.000000e+00> : vector<3x188xf32>
    %86 = tpu.matmul %84, %85, %cst_62 {dimension_numbers = #tpu.dot_dimension_numbers<[1], [0], [0], [1], [0, 0, 1, 1], [], []>} : vector<3x3xf32>, vector<3x188xf32>, vector<3x188xf32> -> vector<3x188xf32>
    %87 = arith.addf %82, %86 : vector<3x188xf32>
    %c8_63 = arith.constant 8 : index
    %c0_64 = arith.constant 0 : index
    %c0_65 = arith.constant 0 : index
    %88 = vector.load %arg4[%c8_63, %c0_64, %c0_65] : memref<9x3x3xf32, #tpu.memory_space<vmem>>, vector<1x3x3xf32>
    %89 = vector.shape_cast %88 : vector<1x3x3xf32> to vector<3x3xf32>
    %90 = vector.extract_strided_slice %48 {offsets = [0, 34], sizes = [3, 188], strides = [1, 1]} : vector<3x222xf32> to vector<3x188xf32>
    %cst_66 = arith.constant dense<0.000000e+00> : vector<3x188xf32>
    %91 = tpu.matmul %89, %90, %cst_66 {dimension_numbers = #tpu.dot_dimension_numbers<[1], [0], [0], [1], [0, 0, 1, 1], [], []>} : vector<3x3xf32>, vector<3x188xf32>, vector<3x188xf32> -> vector<3x188xf32>
    %92 = arith.addf %87, %91 : vector<3x188xf32>
    %c0_67 = arith.constant 0 : index
    %c0_68 = arith.constant 0 : index
    %93 = vector.load %arg5[%c0_67, %c0_68] : memref<3x1xf32, #tpu.memory_space<vmem>>, vector<3x1xf32>
    %94 = vector.broadcast %93 : vector<3x1xf32> to vector<3x188xf32>
    %95 = arith.addf %92, %94 : vector<3x188xf32>
    %c0_69 = arith.constant 0 : index
    %c0_70 = arith.constant 0 : index
    %c0_71 = arith.constant 0 : index
    %96 = vector.load %arg6[%c0_69, %c0_70, %c0_71] : memref<9x3x3xf32, #tpu.memory_space<vmem>>, vector<1x3x3xf32>
    %97 = vector.shape_cast %96 : vector<1x3x3xf32> to vector<3x3xf32>
    %98 = vector.extract_strided_slice %95 {offsets = [0, 0], sizes = [3, 154], strides = [1, 1]} : vector<3x188xf32> to vector<3x154xf32>
    %cst_72 = arith.constant dense<0.000000e+00> : vector<3x154xf32>
    %99 = tpu.matmul %97, %98, %cst_72 {dimension_numbers = #tpu.dot_dimension_numbers<[1], [0], [0], [1], [0, 0, 1, 1], [], []>} : vector<3x3xf32>, vector<3x154xf32>, vector<3x154xf32> -> vector<3x154xf32>
    %c1_73 = arith.constant 1 : index
    %c0_74 = arith.constant 0 : index
    %c0_75 = arith.constant 0 : index
    %100 = vector.load %arg6[%c1_73, %c0_74, %c0_75] : memref<9x3x3xf32, #tpu.memory_space<vmem>>, vector<1x3x3xf32>
    %101 = vector.shape_cast %100 : vector<1x3x3xf32> to vector<3x3xf32>
    %102 = vector.extract_strided_slice %95 {offsets = [0, 1], sizes = [3, 154], strides = [1, 1]} : vector<3x188xf32> to vector<3x154xf32>
    %cst_76 = arith.constant dense<0.000000e+00> : vector<3x154xf32>
    %103 = tpu.matmul %101, %102, %cst_76 {dimension_numbers = #tpu.dot_dimension_numbers<[1], [0], [0], [1], [0, 0, 1, 1], [], []>} : vector<3x3xf32>, vector<3x154xf32>, vector<3x154xf32> -> vector<3x154xf32>
    %104 = arith.addf %99, %103 : vector<3x154xf32>
    %c2_77 = arith.constant 2 : index
    %c0_78 = arith.constant 0 : index
    %c0_79 = arith.constant 0 : index
    %105 = vector.load %arg6[%c2_77, %c0_78, %c0_79] : memref<9x3x3xf32, #tpu.memory_space<vmem>>, vector<1x3x3xf32>
    %106 = vector.shape_cast %105 : vector<1x3x3xf32> to vector<3x3xf32>
    %107 = vector.extract_strided_slice %95 {offsets = [0, 2], sizes = [3, 154], strides = [1, 1]} : vector<3x188xf32> to vector<3x154xf32>
    %cst_80 = arith.constant dense<0.000000e+00> : vector<3x154xf32>
    %108 = tpu.matmul %106, %107, %cst_80 {dimension_numbers = #tpu.dot_dimension_numbers<[1], [0], [0], [1], [0, 0, 1, 1], [], []>} : vector<3x3xf32>, vector<3x154xf32>, vector<3x154xf32> -> vector<3x154xf32>
    %109 = arith.addf %104, %108 : vector<3x154xf32>
    %c3_81 = arith.constant 3 : index
    %c0_82 = arith.constant 0 : index
    %c0_83 = arith.constant 0 : index
    %110 = vector.load %arg6[%c3_81, %c0_82, %c0_83] : memref<9x3x3xf32, #tpu.memory_space<vmem>>, vector<1x3x3xf32>
    %111 = vector.shape_cast %110 : vector<1x3x3xf32> to vector<3x3xf32>
    %112 = vector.extract_strided_slice %95 {offsets = [0, 16], sizes = [3, 154], strides = [1, 1]} : vector<3x188xf32> to vector<3x154xf32>
    %cst_84 = arith.constant dense<0.000000e+00> : vector<3x154xf32>
    %113 = tpu.matmul %111, %112, %cst_84 {dimension_numbers = #tpu.dot_dimension_numbers<[1], [0], [0], [1], [0, 0, 1, 1], [], []>} : vector<3x3xf32>, vector<3x154xf32>, vector<3x154xf32> -> vector<3x154xf32>
    %114 = arith.addf %109, %113 : vector<3x154xf32>
    %c4_85 = arith.constant 4 : index
    %c0_86 = arith.constant 0 : index
    %c0_87 = arith.constant 0 : index
    %115 = vector.load %arg6[%c4_85, %c0_86, %c0_87] : memref<9x3x3xf32, #tpu.memory_space<vmem>>, vector<1x3x3xf32>
    %116 = vector.shape_cast %115 : vector<1x3x3xf32> to vector<3x3xf32>
    %117 = vector.extract_strided_slice %95 {offsets = [0, 17], sizes = [3, 154], strides = [1, 1]} : vector<3x188xf32> to vector<3x154xf32>
    %cst_88 = arith.constant dense<0.000000e+00> : vector<3x154xf32>
    %118 = tpu.matmul %116, %117, %cst_88 {dimension_numbers = #tpu.dot_dimension_numbers<[1], [0], [0], [1], [0, 0, 1, 1], [], []>} : vector<3x3xf32>, vector<3x154xf32>, vector<3x154xf32> -> vector<3x154xf32>
    %119 = arith.addf %114, %118 : vector<3x154xf32>
    %c5_89 = arith.constant 5 : index
    %c0_90 = arith.constant 0 : index
    %c0_91 = arith.constant 0 : index
    %120 = vector.load %arg6[%c5_89, %c0_90, %c0_91] : memref<9x3x3xf32, #tpu.memory_space<vmem>>, vector<1x3x3xf32>
    %121 = vector.shape_cast %120 : vector<1x3x3xf32> to vector<3x3xf32>
    %122 = vector.extract_strided_slice %95 {offsets = [0, 18], sizes = [3, 154], strides = [1, 1]} : vector<3x188xf32> to vector<3x154xf32>
    %cst_92 = arith.constant dense<0.000000e+00> : vector<3x154xf32>
    %123 = tpu.matmul %121, %122, %cst_92 {dimension_numbers = #tpu.dot_dimension_numbers<[1], [0], [0], [1], [0, 0, 1, 1], [], []>} : vector<3x3xf32>, vector<3x154xf32>, vector<3x154xf32> -> vector<3x154xf32>
    %124 = arith.addf %119, %123 : vector<3x154xf32>
    %c6_93 = arith.constant 6 : index
    %c0_94 = arith.constant 0 : index
    %c0_95 = arith.constant 0 : index
    %125 = vector.load %arg6[%c6_93, %c0_94, %c0_95] : memref<9x3x3xf32, #tpu.memory_space<vmem>>, vector<1x3x3xf32>
    %126 = vector.shape_cast %125 : vector<1x3x3xf32> to vector<3x3xf32>
    %127 = vector.extract_strided_slice %95 {offsets = [0, 32], sizes = [3, 154], strides = [1, 1]} : vector<3x188xf32> to vector<3x154xf32>
    %cst_96 = arith.constant dense<0.000000e+00> : vector<3x154xf32>
    %128 = tpu.matmul %126, %127, %cst_96 {dimension_numbers = #tpu.dot_dimension_numbers<[1], [0], [0], [1], [0, 0, 1, 1], [], []>} : vector<3x3xf32>, vector<3x154xf32>, vector<3x154xf32> -> vector<3x154xf32>
    %129 = arith.addf %124, %128 : vector<3x154xf32>
    %c7_97 = arith.constant 7 : index
    %c0_98 = arith.constant 0 : index
    %c0_99 = arith.constant 0 : index
    %130 = vector.load %arg6[%c7_97, %c0_98, %c0_99] : memref<9x3x3xf32, #tpu.memory_space<vmem>>, vector<1x3x3xf32>
    %131 = vector.shape_cast %130 : vector<1x3x3xf32> to vector<3x3xf32>
    %132 = vector.extract_strided_slice %95 {offsets = [0, 33], sizes = [3, 154], strides = [1, 1]} : vector<3x188xf32> to vector<3x154xf32>
    %cst_100 = arith.constant dense<0.000000e+00> : vector<3x154xf32>
    %133 = tpu.matmul %131, %132, %cst_100 {dimension_numbers = #tpu.dot_dimension_numbers<[1], [0], [0], [1], [0, 0, 1, 1], [], []>} : vector<3x3xf32>, vector<3x154xf32>, vector<3x154xf32> -> vector<3x154xf32>
    %134 = arith.addf %129, %133 : vector<3x154xf32>
    %c8_101 = arith.constant 8 : index
    %c0_102 = arith.constant 0 : index
    %c0_103 = arith.constant 0 : index
    %135 = vector.load %arg6[%c8_101, %c0_102, %c0_103] : memref<9x3x3xf32, #tpu.memory_space<vmem>>, vector<1x3x3xf32>
    %136 = vector.shape_cast %135 : vector<1x3x3xf32> to vector<3x3xf32>
    %137 = vector.extract_strided_slice %95 {offsets = [0, 34], sizes = [3, 154], strides = [1, 1]} : vector<3x188xf32> to vector<3x154xf32>
    %cst_104 = arith.constant dense<0.000000e+00> : vector<3x154xf32>
    %138 = tpu.matmul %136, %137, %cst_104 {dimension_numbers = #tpu.dot_dimension_numbers<[1], [0], [0], [1], [0, 0, 1, 1], [], []>} : vector<3x3xf32>, vector<3x154xf32>, vector<3x154xf32> -> vector<3x154xf32>
    %139 = arith.addf %134, %138 : vector<3x154xf32>
    %c0_105 = arith.constant 0 : index
    %c0_106 = arith.constant 0 : index
    %140 = vector.load %arg7[%c0_105, %c0_106] : memref<3x1xf32, #tpu.memory_space<vmem>>, vector<3x1xf32>
    %141 = vector.broadcast %140 : vector<3x1xf32> to vector<3x154xf32>
    %142 = arith.addf %139, %141 : vector<3x154xf32>
    %cst_107 = arith.constant 0.000000e+00 : f32
    %143 = vector.broadcast %cst_107 : f32 to vector<3x154xf32>
    %144 = arith.maximumf %142, %143 : vector<3x154xf32>
    %c0_108 = arith.constant 0 : index
    %c0_109 = arith.constant 0 : index
    %c0_110 = arith.constant 0 : index
    %145 = vector.load %arg8[%c0_108, %c0_109, %c0_110] : memref<9x3x3xf32, #tpu.memory_space<vmem>>, vector<1x3x3xf32>
    %146 = vector.shape_cast %145 : vector<1x3x3xf32> to vector<3x3xf32>
    %147 = vector.extract_strided_slice %144 {offsets = [0, 0], sizes = [3, 120], strides = [1, 1]} : vector<3x154xf32> to vector<3x120xf32>
    %cst_111 = arith.constant dense<0.000000e+00> : vector<3x120xf32>
    %148 = tpu.matmul %146, %147, %cst_111 {dimension_numbers = #tpu.dot_dimension_numbers<[1], [0], [0], [1], [0, 0, 1, 1], [], []>} : vector<3x3xf32>, vector<3x120xf32>, vector<3x120xf32> -> vector<3x120xf32>
    %c1_112 = arith.constant 1 : index
    %c0_113 = arith.constant 0 : index
    %c0_114 = arith.constant 0 : index
    %149 = vector.load %arg8[%c1_112, %c0_113, %c0_114] : memref<9x3x3xf32, #tpu.memory_space<vmem>>, vector<1x3x3xf32>
    %150 = vector.shape_cast %149 : vector<1x3x3xf32> to vector<3x3xf32>
    %151 = vector.extract_strided_slice %144 {offsets = [0, 1], sizes = [3, 120], strides = [1, 1]} : vector<3x154xf32> to vector<3x120xf32>
    %cst_115 = arith.constant dense<0.000000e+00> : vector<3x120xf32>
    %152 = tpu.matmul %150, %151, %cst_115 {dimension_numbers = #tpu.dot_dimension_numbers<[1], [0], [0], [1], [0, 0, 1, 1], [], []>} : vector<3x3xf32>, vector<3x120xf32>, vector<3x120xf32> -> vector<3x120xf32>
    %153 = arith.addf %148, %152 : vector<3x120xf32>
    %c2_116 = arith.constant 2 : index
    %c0_117 = arith.constant 0 : index
    %c0_118 = arith.constant 0 : index
    %154 = vector.load %arg8[%c2_116, %c0_117, %c0_118] : memref<9x3x3xf32, #tpu.memory_space<vmem>>, vector<1x3x3xf32>
    %155 = vector.shape_cast %154 : vector<1x3x3xf32> to vector<3x3xf32>
    %156 = vector.extract_strided_slice %144 {offsets = [0, 2], sizes = [3, 120], strides = [1, 1]} : vector<3x154xf32> to vector<3x120xf32>
    %cst_119 = arith.constant dense<0.000000e+00> : vector<3x120xf32>
    %157 = tpu.matmul %155, %156, %cst_119 {dimension_numbers = #tpu.dot_dimension_numbers<[1], [0], [0], [1], [0, 0, 1, 1], [], []>} : vector<3x3xf32>, vector<3x120xf32>, vector<3x120xf32> -> vector<3x120xf32>
    %158 = arith.addf %153, %157 : vector<3x120xf32>
    %c3_120 = arith.constant 3 : index
    %c0_121 = arith.constant 0 : index
    %c0_122 = arith.constant 0 : index
    %159 = vector.load %arg8[%c3_120, %c0_121, %c0_122] : memref<9x3x3xf32, #tpu.memory_space<vmem>>, vector<1x3x3xf32>
    %160 = vector.shape_cast %159 : vector<1x3x3xf32> to vector<3x3xf32>
    %161 = vector.extract_strided_slice %144 {offsets = [0, 16], sizes = [3, 120], strides = [1, 1]} : vector<3x154xf32> to vector<3x120xf32>
    %cst_123 = arith.constant dense<0.000000e+00> : vector<3x120xf32>
    %162 = tpu.matmul %160, %161, %cst_123 {dimension_numbers = #tpu.dot_dimension_numbers<[1], [0], [0], [1], [0, 0, 1, 1], [], []>} : vector<3x3xf32>, vector<3x120xf32>, vector<3x120xf32> -> vector<3x120xf32>
    %163 = arith.addf %158, %162 : vector<3x120xf32>
    %c4_124 = arith.constant 4 : index
    %c0_125 = arith.constant 0 : index
    %c0_126 = arith.constant 0 : index
    %164 = vector.load %arg8[%c4_124, %c0_125, %c0_126] : memref<9x3x3xf32, #tpu.memory_space<vmem>>, vector<1x3x3xf32>
    %165 = vector.shape_cast %164 : vector<1x3x3xf32> to vector<3x3xf32>
    %166 = vector.extract_strided_slice %144 {offsets = [0, 17], sizes = [3, 120], strides = [1, 1]} : vector<3x154xf32> to vector<3x120xf32>
    %cst_127 = arith.constant dense<0.000000e+00> : vector<3x120xf32>
    %167 = tpu.matmul %165, %166, %cst_127 {dimension_numbers = #tpu.dot_dimension_numbers<[1], [0], [0], [1], [0, 0, 1, 1], [], []>} : vector<3x3xf32>, vector<3x120xf32>, vector<3x120xf32> -> vector<3x120xf32>
    %168 = arith.addf %163, %167 : vector<3x120xf32>
    %c5_128 = arith.constant 5 : index
    %c0_129 = arith.constant 0 : index
    %c0_130 = arith.constant 0 : index
    %169 = vector.load %arg8[%c5_128, %c0_129, %c0_130] : memref<9x3x3xf32, #tpu.memory_space<vmem>>, vector<1x3x3xf32>
    %170 = vector.shape_cast %169 : vector<1x3x3xf32> to vector<3x3xf32>
    %171 = vector.extract_strided_slice %144 {offsets = [0, 18], sizes = [3, 120], strides = [1, 1]} : vector<3x154xf32> to vector<3x120xf32>
    %cst_131 = arith.constant dense<0.000000e+00> : vector<3x120xf32>
    %172 = tpu.matmul %170, %171, %cst_131 {dimension_numbers = #tpu.dot_dimension_numbers<[1], [0], [0], [1], [0, 0, 1, 1], [], []>} : vector<3x3xf32>, vector<3x120xf32>, vector<3x120xf32> -> vector<3x120xf32>
    %173 = arith.addf %168, %172 : vector<3x120xf32>
    %c6_132 = arith.constant 6 : index
    %c0_133 = arith.constant 0 : index
    %c0_134 = arith.constant 0 : index
    %174 = vector.load %arg8[%c6_132, %c0_133, %c0_134] : memref<9x3x3xf32, #tpu.memory_space<vmem>>, vector<1x3x3xf32>
    %175 = vector.shape_cast %174 : vector<1x3x3xf32> to vector<3x3xf32>
    %176 = vector.extract_strided_slice %144 {offsets = [0, 32], sizes = [3, 120], strides = [1, 1]} : vector<3x154xf32> to vector<3x120xf32>
    %cst_135 = arith.constant dense<0.000000e+00> : vector<3x120xf32>
    %177 = tpu.matmul %175, %176, %cst_135 {dimension_numbers = #tpu.dot_dimension_numbers<[1], [0], [0], [1], [0, 0, 1, 1], [], []>} : vector<3x3xf32>, vector<3x120xf32>, vector<3x120xf32> -> vector<3x120xf32>
    %178 = arith.addf %173, %177 : vector<3x120xf32>
    %c7_136 = arith.constant 7 : index
    %c0_137 = arith.constant 0 : index
    %c0_138 = arith.constant 0 : index
    %179 = vector.load %arg8[%c7_136, %c0_137, %c0_138] : memref<9x3x3xf32, #tpu.memory_space<vmem>>, vector<1x3x3xf32>
    %180 = vector.shape_cast %179 : vector<1x3x3xf32> to vector<3x3xf32>
    %181 = vector.extract_strided_slice %144 {offsets = [0, 33], sizes = [3, 120], strides = [1, 1]} : vector<3x154xf32> to vector<3x120xf32>
    %cst_139 = arith.constant dense<0.000000e+00> : vector<3x120xf32>
    %182 = tpu.matmul %180, %181, %cst_139 {dimension_numbers = #tpu.dot_dimension_numbers<[1], [0], [0], [1], [0, 0, 1, 1], [], []>} : vector<3x3xf32>, vector<3x120xf32>, vector<3x120xf32> -> vector<3x120xf32>
    %183 = arith.addf %178, %182 : vector<3x120xf32>
    %c8_140 = arith.constant 8 : index
    %c0_141 = arith.constant 0 : index
    %c0_142 = arith.constant 0 : index
    %184 = vector.load %arg8[%c8_140, %c0_141, %c0_142] : memref<9x3x3xf32, #tpu.memory_space<vmem>>, vector<1x3x3xf32>
    %185 = vector.shape_cast %184 : vector<1x3x3xf32> to vector<3x3xf32>
    %186 = vector.extract_strided_slice %144 {offsets = [0, 34], sizes = [3, 120], strides = [1, 1]} : vector<3x154xf32> to vector<3x120xf32>
    %cst_143 = arith.constant dense<0.000000e+00> : vector<3x120xf32>
    %187 = tpu.matmul %185, %186, %cst_143 {dimension_numbers = #tpu.dot_dimension_numbers<[1], [0], [0], [1], [0, 0, 1, 1], [], []>} : vector<3x3xf32>, vector<3x120xf32>, vector<3x120xf32> -> vector<3x120xf32>
    %188 = arith.addf %183, %187 : vector<3x120xf32>
    %c0_144 = arith.constant 0 : index
    %c0_145 = arith.constant 0 : index
    %189 = vector.load %arg9[%c0_144, %c0_145] : memref<3x1xf32, #tpu.memory_space<vmem>>, vector<3x1xf32>
    %190 = vector.broadcast %189 : vector<3x1xf32> to vector<3x120xf32>
    %191 = arith.addf %188, %190 : vector<3x120xf32>
    %c0_146 = arith.constant 0 : index
    %c0_147 = arith.constant 0 : index
    %c0_148 = arith.constant 0 : index
    %192 = vector.load %arg10[%c0_146, %c0_147, %c0_148] : memref<1x3x120xf32, #tpu.memory_space<vmem>>, vector<1x3x120xf32>
    %193 = vector.shape_cast %192 : vector<1x3x120xf32> to vector<3x120xf32>
    %194 = vector.shape_cast %191 : vector<3x120xf32> to vector<1x3x120xf32>
    tpu.vector_store %arg10[%c0_146, %c0_147, %c0_148], %194 {strides = array<i32>} : memref<1x3x120xf32, #tpu.memory_space<vmem>>, vector<1x3x120xf32>,
    return
  }
  func.func @transform_0(%arg0: i32) -> (i32, i32, i32) {
    %c0_i32 = arith.constant 0 : i32
    %c0_i32_0 = arith.constant 0 : i32
    %c0_i32_1 = arith.constant 0 : i32
    return %arg0, %c0_i32, %c0_i32_0 : i32, i32, i32
  }
  func.func @transform_1(%arg0: i32) -> (i32, i32, i32) {
    %c0_i32 = arith.constant 0 : i32
    %c0_i32_0 = arith.constant 0 : i32
    %c0_i32_1 = arith.constant 0 : i32
    %c0_i32_2 = arith.constant 0 : i32
    return %c0_i32, %c0_i32_0, %c0_i32_1 : i32, i32, i32
  }
  func.func @transform_2(%arg0: i32) -> (i32, i32) {
    %c0_i32 = arith.constant 0 : i32
    %c0_i32_0 = arith.constant 0 : i32
    %c0_i32_1 = arith.constant 0 : i32
    return %c0_i32, %c0_i32_0 : i32, i32
  }
  func.func @transform_3(%arg0: i32) -> (i32, i32, i32) {
    %c0_i32 = arith.constant 0 : i32
    %c0_i32_0 = arith.constant 0 : i32
    %c0_i32_1 = arith.constant 0 : i32
    %c0_i32_2 = arith.constant 0 : i32
    return %c0_i32, %c0_i32_0, %c0_i32_1 : i32, i32, i32
  }
  func.func @transform_4(%arg0: i32) -> (i32, i32) {
    %c0_i32 = arith.constant 0 : i32
    %c0_i32_0 = arith.constant 0 : i32
    %c0_i32_1 = arith.constant 0 : i32
    return %c0_i32, %c0_i32_0 : i32, i32
  }
  func.func @transform_5(%arg0: i32) -> (i32, i32, i32) {
    %c0_i32 = arith.constant 0 : i32
    %c0_i32_0 = arith.constant 0 : i32
    %c0_i32_1 = arith.constant 0 : i32
    %c0_i32_2 = arith.constant 0 : i32
    return %c0_i32, %c0_i32_0, %c0_i32_1 : i32, i32, i32
  }
  func.func @transform_6(%arg0: i32) -> (i32, i32) {
    %c0_i32 = arith.constant 0 : i32
    %c0_i32_0 = arith.constant 0 : i32
    %c0_i32_1 = arith.constant 0 : i32
    return %c0_i32, %c0_i32_0 : i32, i32
  }
  func.func @transform_7(%arg0: i32) -> (i32, i32, i32) {
    %c0_i32 = arith.constant 0 : i32
    %c0_i32_0 = arith.constant 0 : i32
    %c0_i32_1 = arith.constant 0 : i32
    %c0_i32_2 = arith.constant 0 : i32
    return %c0_i32, %c0_i32_0, %c0_i32_1 : i32, i32, i32
  }
  func.func @transform_8(%arg0: i32) -> (i32, i32) {
    %c0_i32 = arith.constant 0 : i32
    %c0_i32_0 = arith.constant 0 : i32
    %c0_i32_1 = arith.constant 0 : i32
    return %c0_i32, %c0_i32_0 : i32, i32
  }
  func.func @transform_9(%arg0: i32) -> (i32, i32, i32) {
    %c0_i32 = arith.constant 0 : i32
    %c0_i32_0 = arith.constant 0 : i32
    %c0_i32_1 = arith.constant 0 : i32
    return %arg0, %c0_i32, %c0_i32_0 : i32, i32, i32
  }
}

</mosaic_0001>

<llo_original>
// kernel: tpu_custom_call.1
$region0: #{tpu_custom_call.1}
  #allocation0 [shape = 'u32[]', space=smem, size = 0x4, offset = 0x4, fixed_abs, tag = 'smem constant byte address 0x4 - core index']
  #allocation1 [shape = 'u32[72,128]{1,0:T(1,128)}', space=vmem, size = 0x9000, scoped, tag = 'internal scratch']
  %s0 = inlined_call_operand.vmem [shape: f32[2,3,256], index: 0, kind: input, shape index: {}]
  %s1 = inlined_call_operand.vmem [shape: f32[9,3,3], index: 1, kind: input, shape index: {}]
  %s2 = inlined_call_operand.vmem [shape: f32[3,1], index: 2, kind: input, shape index: {}]
  %s3 = inlined_call_operand.vmem [shape: f32[9,3,3], index: 3, kind: input, shape index: {}]
  %s4 = inlined_call_operand.vmem [shape: f32[3,1], index: 4, kind: input, shape index: {}]
  %s5 = inlined_call_operand.vmem [shape: f32[9,3,3], index: 5, kind: input, shape index: {}]
  %s6 = inlined_call_operand.vmem [shape: f32[3,1], index: 6, kind: input, shape index: {}]
  %s7 = inlined_call_operand.vmem [shape: f32[9,3,3], index: 7, kind: input, shape index: {}]
  %s8 = inlined_call_operand.vmem [shape: f32[3,1], index: 8, kind: input, shape index: {}]
  %s9 = inlined_call_operand.vmem [shape: f32[2,3,120], index: 9, kind: output, shape index: {}]
  %s10 = sld [smem:[#allocation0]]
  $region69: #{tpu_custom_call.1} parent=0
    _
  %s12 = ssub.s32 1, %s10
  %s13 = scalar_select 0, %s12, %s10
  loop: start=0, step=1, limit=4
  $region2: #{tpu_custom_call.1} parent=0 // loop_pre_header
    _
  $region3: #{tpu_custom_call.1} parent=0 // loop_header
    %s15 = sphi 0, %s19
    %p16 = scmp.ge.s32.totalorder %s15, 4
    %s25 = sphi 0, %s27
    %s28 = sphi 0, %s25
    %s29 = sphi 0, %s28
    %s45 = sphi 0, %s29
    %s49 = sphi 0, %s49
    %s51 = sphi 0, %s49
    %s52 = sphi 0, %s51
    %s66 = sphi 0, %s52
    %s70 = sphi 0, %s70
    %s72 = sphi 0, %s70
    %s73 = sphi 0, %s72
    %s87 = sphi 0, %s73
    %s91 = sphi 0, %s91
    %s93 = sphi 0, %s91
    %s94 = sphi 0, %s93
    %s108 = sphi 0, %s94
    %s112 = sphi 0, %s112
    %s114 = sphi 0, %s112
    %s115 = sphi 0, %s114
    %s129 = sphi 0, %s115
    %s133 = sphi 0, %s133
    %s135 = sphi 0, %s133
    %s136 = sphi 0, %s135
    %s150 = sphi 0, %s136
    %s154 = sphi 0, %s154
    %s156 = sphi 0, %s154
    %s157 = sphi 0, %s156
    %s171 = sphi 0, %s157
    %s175 = sphi 0, %s175
    %s177 = sphi 0, %s175
    %s178 = sphi 0, %s177
    %s192 = sphi 0, %s178
    %s196 = sphi 0, %s196
    %s198 = sphi 0, %s196
    %s199 = sphi 0, %s198
    %s213 = sphi 0, %s199
    %s219 = sphi 0, %s221
    %s222 = sphi 0, %s219
    %s223 = sphi 0, %s222
    %s239 = sphi 0, %s223
  $region4: #{tpu_custom_call.1} parent=0 // loop_header_branch
    %18 = sbr.rel (%p16) target = $region8
  $region5: #{tpu_custom_call.1} parent=0 // loop_body
    %s20 = ssub.s32 %s15, 1
    %s21 = ssub.s32 %s15, 2
    %s22 = sadd.s32 %s15, 1
    %s23 = ssub.s32 %s15, %s22
    %p24 = scmp.eq.s32.totalorder %s23, 0
    %s26 = sadd.s32 %s25, 1
    %s27 = scalar_select %p24, %s25, %s26
    %p30 = pneg %p24
    %p31 = scmp.eq.s32.totalorder %s15, 1
    %p32 = por %p30, %p31
    %p33 = scmp.ne.s32.totalorder %s25, %s28
    %p34 = scmp.eq.s32.totalorder %s15, 0
    %p35 = por %p33, %p34
    %p36 = scmp.ne.s32.totalorder %s25, %s28
    %p37 = scmp.eq.s32.totalorder %s20, 1
    %p38 = por %p36, %p37
    %p39 = scmp.ne.s32.totalorder %s28, %s29
    %p40 = scmp.eq.s32.totalorder %s20, 0
    %p41 = por %p39, %p40
    %p42 = scmp.ne.s32.totalorder %s28, %s29
    %p43 = scmp.eq.s32.totalorder %s21, 1
    %p44 = por %p42, %p43
    %p46 = scmp.ne.s32.totalorder %s29, %s45
    %p47 = scmp.eq.s32.totalorder %s21, 0
    %p48 = por %p46, %p47
    %s50 = sadd.s32 %s49, 1
    %p53 = scmp.eq.s32.totalorder %s15, 1
    %p54 = scmp.ne.s32.totalorder %s49, %s51
    %p55 = scmp.eq.s32.totalorder %s15, 0
    %p56 = por %p54, %p55
    %p57 = scmp.ne.s32.totalorder %s49, %s51
    %p58 = scmp.eq.s32.totalorder %s20, 1
    %p59 = por %p57, %p58
    %p60 = scmp.ne.s32.totalorder %s51, %s52
    %p61 = scmp.eq.s32.totalorder %s20, 0
    %p62 = por %p60, %p61
    %p63 = scmp.ne.s32.totalorder %s51, %s52
    %p64 = scmp.eq.s32.totalorder %s21, 1
    %p65 = por %p63, %p64
    %p67 = scmp.ne.s32.totalorder %s52, %s66
    %p68 = scmp.eq.s32.totalorder %s21, 0
    %p69 = por %p67, %p68
    %s71 = sadd.s32 %s70, 1
    %p74 = scmp.eq.s32.totalorder %s15, 1
    %p75 = scmp.ne.s32.totalorder %s70, %s72
    %p76 = scmp.eq.s32.totalorder %s15, 0
    %p77 = por %p75, %p76
    %p78 = scmp.ne.s32.totalorder %s70, %s72
    %p79 = scmp.eq.s32.totalorder %s20, 1
    %p80 = por %p78, %p79
    %p81 = scmp.ne.s32.totalorder %s72, %s73
    %p82 = scmp.eq.s32.totalorder %s20, 0
    %p83 = por %p81, %p82
    %p84 = scmp.ne.s32.totalorder %s72, %s73
    %p85 = scmp.eq.s32.totalorder %s21, 1
    %p86 = por %p84, %p85
    %p88 = scmp.ne.s32.totalorder %s73, %s87
    %p89 = scmp.eq.s32.totalorder %s21, 0
    %p90 = por %p88, %p89
    %s92 = sadd.s32 %s91, 1
    %p95 = scmp.eq.s32.totalorder %s15, 1
    %p96 = scmp.ne.s32.totalorder %s91, %s93
    %p97 = scmp.eq.s32.totalorder %s15, 0
    %p98 = por %p96, %p97
    %p99 = scmp.ne.s32.totalorder %s91, %s93
    %p100 = scmp.eq.s32.totalorder %s20, 1
    %p101 = por %p99, %p100
    %p102 = scmp.ne.s32.totalorder %s93, %s94
    %p103 = scmp.eq.s32.totalorder %s20, 0
    %p104 = por %p102, %p103
    %p105 = scmp.ne.s32.totalorder %s93, %s94
    %p106 = scmp.eq.s32.totalorder %s21, 1
    %p107 = por %p105, %p106
    %p109 = scmp.ne.s32.totalorder %s94, %s108
    %p110 = scmp.eq.s32.totalorder %s21, 0
    %p111 = por %p109, %p110
    %s113 = sadd.s32 %s112, 1
    %p116 = scmp.eq.s32.totalorder %s15, 1
    %p117 = scmp.ne.s32.totalorder %s112, %s114
    %p118 = scmp.eq.s32.totalorder %s15, 0
    %p119 = por %p117, %p118
    %p120 = scmp.ne.s32.totalorder %s112, %s114
    %p121 = scmp.eq.s32.totalorder %s20, 1
    %p122 = por %p120, %p121
    %p123 = scmp.ne.s32.totalorder %s114, %s115
    %p124 = scmp.eq.s32.totalorder %s20, 0
    %p125 = por %p123, %p124
    %p126 = scmp.ne.s32.totalorder %s114, %s115
    %p127 = scmp.eq.s32.totalorder %s21, 1
    %p128 = por %p126, %p127
    %p130 = scmp.ne.s32.totalorder %s115, %s129
    %p131 = scmp.eq.s32.totalorder %s21, 0
    %p132 = por %p130, %p131
    %s134 = sadd.s32 %s133, 1
    %p137 = scmp.eq.s32.totalorder %s15, 1
    %p138 = scmp.ne.s32.totalorder %s133, %s135
    %p139 = scmp.eq.s32.totalorder %s15, 0
    %p140 = por %p138, %p139
    %p141 = scmp.ne.s32.totalorder %s133, %s135
    %p142 = scmp.eq.s32.totalorder %s20, 1
    %p143 = por %p141, %p142
    %p144 = scmp.ne.s32.totalorder %s135, %s136
    %p145 = scmp.eq.s32.totalorder %s20, 0
    %p146 = por %p144, %p145
    %p147 = scmp.ne.s32.totalorder %s135, %s136
    %p148 = scmp.eq.s32.totalorder %s21, 1
    %p149 = por %p147, %p148
    %p151 = scmp.ne.s32.totalorder %s136, %s150
    %p152 = scmp.eq.s32.totalorder %s21, 0
    %p153 = por %p151, %p152
    %s155 = sadd.s32 %s154, 1
    %p158 = scmp.eq.s32.totalorder %s15, 1
    %p159 = scmp.ne.s32.totalorder %s154, %s156
    %p160 = scmp.eq.s32.totalorder %s15, 0
    %p161 = por %p159, %p160
    %p162 = scmp.ne.s32.totalorder %s154, %s156
    %p163 = scmp.eq.s32.totalorder %s20, 1
    %p164 = por %p162, %p163
    %p165 = scmp.ne.s32.totalorder %s156, %s157
    %p166 = scmp.eq.s32.totalorder %s20, 0
    %p167 = por %p165, %p166
    %p168 = scmp.ne.s32.totalorder %s156, %s157
    %p169 = scmp.eq.s32.totalorder %s21, 1
    %p170 = por %p168, %p169
    %p172 = scmp.ne.s32.totalorder %s157, %s171
    %p173 = scmp.eq.s32.totalorder %s21, 0
    %p174 = por %p172, %p173
    %s176 = sadd.s32 %s175, 1
    %p179 = scmp.eq.s32.totalorder %s15, 1
    %p180 = scmp.ne.s32.totalorder %s175, %s177
    %p181 = scmp.eq.s32.totalorder %s15, 0
    %p182 = por %p180, %p181
    %p183 = scmp.ne.s32.totalorder %s175, %s177
    %p184 = scmp.eq.s32.totalorder %s20, 1
    %p185 = por %p183, %p184
    %p186 = scmp.ne.s32.totalorder %s177, %s178
    %p187 = scmp.eq.s32.totalorder %s20, 0
    %p188 = por %p186, %p187
    %p189 = scmp.ne.s32.totalorder %s177, %s178
    %p190 = scmp.eq.s32.totalorder %s21, 1
    %p191 = por %p189, %p190
    %p193 = scmp.ne.s32.totalorder %s178, %s192
    %p194 = scmp.eq.s32.totalorder %s21, 0
    %p195 = por %p193, %p194
    %s197 = sadd.s32 %s196, 1
    %p200 = scmp.eq.s32.totalorder %s15, 1
    %p201 = scmp.ne.s32.totalorder %s196, %s198
    %p202 = scmp.eq.s32.totalorder %s15, 0
    %p203 = por %p201, %p202
    %p204 = scmp.ne.s32.totalorder %s196, %s198
    %p205 = scmp.eq.s32.totalorder %s20, 1
    %p206 = por %p204, %p205
    %p207 = scmp.ne.s32.totalorder %s198, %s199
    %p208 = scmp.eq.s32.totalorder %s20, 0
    %p209 = por %p207, %p208
    %p210 = scmp.ne.s32.totalorder %s198, %s199
    %p211 = scmp.eq.s32.totalorder %s21, 1
    %p212 = por %p210, %p211
    %p214 = scmp.ne.s32.totalorder %s199, %s213
    %p215 = scmp.eq.s32.totalorder %s21, 0
    %p216 = por %p214, %p215
    %s217 = ssub.s32 %s15, %s22
    %p218 = scmp.eq.s32.totalorder %s217, 0
    %s220 = sadd.s32 %s219, 1
    %s221 = scalar_select %p218, %s219, %s220
    %p224 = pneg %p218
    %p225 = scmp.eq.s32.totalorder %s15, 1
    %p226 = por %p224, %p225
    %p227 = scmp.ne.s32.totalorder %s219, %s222
    %p228 = scmp.eq.s32.totalorder %s15, 0
    %p229 = por %p227, %p228
    %p230 = scmp.ne.s32.totalorder %s219, %s222
    %p231 = scmp.eq.s32.totalorder %s20, 1
    %p232 = por %p230, %p231
    %p233 = scmp.ne.s32.totalorder %s222, %s223
    %p234 = scmp.eq.s32.totalorder %s20, 0
    %p235 = por %p233, %p234
    %p236 = scmp.ne.s32.totalorder %s222, %s223
    %p237 = scmp.eq.s32.totalorder %s21, 1
    %p238 = por %p236, %p237
    %p240 = scmp.ne.s32.totalorder %s223, %s239
    %p241 = scmp.eq.s32.totalorder %s21, 0
    %p242 = por %p240, %p241
    %p243 = scmp.le.s32.totalorder 1, %s15
    %p244 = scmp.lt.s32.totalorder %s15, 3
    %p245 = pnand %p243, %p244
    %p246 = pneg %p245
    // Predicated region
    $region9: #{tpu_custom_call.1} parent=5 // pred_check
      _
    $region10: #{tpu_custom_call.1} parent=5 // pred_check_branch
      %248 = sbr.rel (%p245) target = $region12
    $region11: #{tpu_custom_call.1} parent=5 // pred_region
      %s249 = ssub.s32 %s15, 1
      // Predicated region
      $region13: #{tpu_custom_call.1} parent=11 // pred_check
        %p250 = pneg %p62
      $region14: #{tpu_custom_call.1} parent=11 // pred_check_branch
        %252 = sbr.rel (%p250) target = $region16
      $region15: #{tpu_custom_call.1} parent=11 // pred_region
        _
      $region16: #{tpu_custom_call.1} parent=11 // pred_fallthru
        _
      // Predicated region
      $region17: #{tpu_custom_call.1} parent=11 // pred_check
        %p253 = pneg %p83
      $region18: #{tpu_custom_call.1} parent=11 // pred_check_branch
        %255 = sbr.rel (%p253) target = $region20
      $region19: #{tpu_custom_call.1} parent=11 // pred_region
        _
      $region20: #{tpu_custom_call.1} parent=11 // pred_fallthru
        _
      // Predicated region
      $region21: #{tpu_custom_call.1} parent=11 // pred_check
        %p256 = pneg %p104
      $region22: #{tpu_custom_call.1} parent=11 // pred_check_branch
        %258 = sbr.rel (%p256) target = $region24
      $region23: #{tpu_custom_call.1} parent=11 // pred_region
        _
      $region24: #{tpu_custom_call.1} parent=11 // pred_fallthru
        _
      // Predicated region
      $region25: #{tpu_custom_call.1} parent=11 // pred_check
        %p259 = pneg %p125
      $region26: #{tpu_custom_call.1} parent=11 // pred_check_branch
        %261 = sbr.rel (%p259) target = $region28
      $region27: #{tpu_custom_call.1} parent=11 // pred_region
        _
      $region28: #{tpu_custom_call.1} parent=11 // pred_fallthru
        _
      // Predicated region
      $region29: #{tpu_custom_call.1} parent=11 // pred_check
        %p262 = pneg %p146
      $region30: #{tpu_custom_call.1} parent=11 // pred_check_branch
        %264 = sbr.rel (%p262) target = $region32
      $region31: #{tpu_custom_call.1} parent=11 // pred_region
        _
      $region32: #{tpu_custom_call.1} parent=11 // pred_fallthru
        _
      // Predicated region
      $region33: #{tpu_custom_call.1} parent=11 // pred_check
        %p265 = pneg %p167
      $region34: #{tpu_custom_call.1} parent=11 // pred_check_branch
        %267 = sbr.rel (%p265) target = $region36
      $region35: #{tpu_custom_call.1} parent=11 // pred_region
        _
      $region36: #{tpu_custom_call.1} parent=11 // pred_fallthru
        _
      // Predicated region
      $region37: #{tpu_custom_call.1} parent=11 // pred_check
        %p268 = pneg %p188
      $region38: #{tpu_custom_call.1} parent=11 // pred_check_branch
        %270 = sbr.rel (%p268) target = $region40
      $region39: #{tpu_custom_call.1} parent=11 // pred_region
        _
      $region40: #{tpu_custom_call.1} parent=11 // pred_fallthru
        _
      // Predicated region
      $region41: #{tpu_custom_call.1} parent=11 // pred_check
        %p271 = pneg %p209
      $region42: #{tpu_custom_call.1} parent=11 // pred_check_branch
        %273 = sbr.rel (%p271) target = $region44
      $region43: #{tpu_custom_call.1} parent=11 // pred_region
        _
      $region44: #{tpu_custom_call.1} parent=11 // pred_fallthru
        _
    $region12: #{tpu_custom_call.1} parent=5 // pred_fallthru
      _
    %p274 = scmp.lt.s32.totalorder %s15, 2
    // Predicated region
    $region45: #{tpu_custom_call.1} parent=5 // pred_check
      %p275 = pneg %p274
    $region46: #{tpu_custom_call.1} parent=5 // pred_check_branch
      %277 = sbr.rel (%p275) target = $region48
    $region47: #{tpu_custom_call.1} parent=5 // pred_region
      // Predicated region
      $region49: #{tpu_custom_call.1} parent=47 // pred_check
        %p278 = pneg %p35
      $region50: #{tpu_custom_call.1} parent=47 // pred_check_branch
        %280 = sbr.rel (%p278) target = $region52
      $region51: #{tpu_custom_call.1} parent=47 // pred_region
        %p281 = scmp.lt.s32.totalorder %s15, 1
        %s282 = scalar_select %p281, %s15, 1
        %s283 = smul.addr %s282, 2
        %s284 = smul.addr %s283, 4
        %s285 = scalar_lea.vmem %s0, %s284
      $region52: #{tpu_custom_call.1} parent=47 // pred_fallthru
        _
    $region48: #{tpu_custom_call.1} parent=5 // pred_fallthru
      _
    %p286 = scmp.le.s32.totalorder 1, %s15
    %p287 = scmp.lt.s32.totalorder %s15, 3
    %p288 = pnand %p286, %p287
    %p289 = pneg %p288
    // Predicated region
    $region53: #{tpu_custom_call.1} parent=5 // pred_check
      _
    $region54: #{tpu_custom_call.1} parent=5 // pred_check_branch
      %291 = sbr.rel (%p288) target = $region56
    $region55: #{tpu_custom_call.1} parent=5 // pred_region
      %s292 = ssub.s32 %s15, 1
      %p293 = scmp.lt.s32.totalorder %s20, 1
      %s294 = scalar_select %p293, %s20, 1
      %s295 = smul.addr %s294, 2
      %s296 = smul.addr %s295, 4
      %s297 = scalar_lea.vmem %s0, %s296
      %p298 = pneg %p41
      %p299 = pneg %p38
      %p300 = pneg %p62
      %p301 = pneg %p59
      %p302 = pneg %p83
      %p303 = pneg %p80
      %p304 = pneg %p104
      %p305 = pneg %p101
      %p306 = pneg %p125
      %p307 = pneg %p122
      %p308 = pneg %p146
      %p309 = pneg %p143
      %p310 = pneg %p167
      %p311 = pneg %p164
      %p312 = pneg %p188
      %p313 = pneg %p185
      %p314 = pneg %p209
      %p315 = pneg %p206
      %p316 = pneg %p235
      %p317 = pneg %p232
      %p318 = scmp.lt.s32.totalorder %s20, 1
      %s319 = scalar_select %p318, %s20, 1
      %s320 = smul.addr %s319, 4
      %s321 = scalar_lea.vmem %s9, %s320
      %p322 = scmp.lt.s32.totalorder %s20, 1
      %s323 = scalar_select %p322, %s20, 1
      %s324 = smul.addr %s323, 2
      %s325 = smul.addr %s324, 4
      %s326 = scalar_lea.vmem %s0, %s325
      %p327 = scmp.lt.s32.totalorder %s20, 1
      %s328 = scalar_select %p327, %s20, 1
      %s329 = smul.addr %s328, 4
      %s330 = scalar_lea.vmem %s9, %s329
      %v331 = vld [vmem:[%s326] sm:$0x77]
      %v332 = vld [vmem:[%s1] sm:$0x7]
      %s333 = scalar_lea.vmem %s1, 4
      %v334 = vld [vmem:[%s333] sm:$0x7]
      %336 = vst [vmem:[#allocation1] ss:$2 sm:$0xff] %v331
      %v337 = vld.sshfl [vmem:[#allocation1] sm:$0xff pattern:$0x75316420]
      %v338 = vld.sshfl [vmem:[#allocation1 + $0x8] sm:$0xff pattern:$0x75316420]
      %339 = vrot.lane.b32.xlu0 %v337, 127
      %v340 = vpop.permute.xlu0 %339
      %341 = vrot.lane.b32.xlu0 %v338, 127
      %v342 = vpop.permute.xlu0 %341
      %vm343 = vcmask 1039360
      %v344 = vsel %vm343, %v340, %v342
      %vm345 = vcmask 23552
      %v347 = vsel %vm345, %v334, 0
      %vm349 = vcmask 1042432
      %v350 = vsel %vm349, %v344, 0
      %v352 = vsel %vm349, %v342, 0
      %354 = vmatpush.msra.mxu0 0.0
      %355 = vmatpush.msra.mxu0 0.0
      %356 = vmatpush.msra.mxu0 0.0
      %357 = vmatpush.msra.mxu0 0.0
      %358 = vmatpush.msra.mxu0 0.0
      %359 = vmatpush.msra.mxu0 0.0
      %360 = vmatpush.msra.mxu0 0.0
      %361 = vmatpush.msra.mxu0 0.0
      %362 = vmatpush.msra.mxu0 0.0
      %363 = vmatpush.msra.mxu0 0.0
      %364 = vmatpush.msra.mxu0 0.0
      %365 = vmatpush.msra.mxu0 0.0
      %366 = vmatpush.msra.mxu0 0.0
      %367 = vmatpush.msra.mxu0 0.0
      %368 = vmatpush.msra.mxu0 0.0
      %369 = vmatpush.msra.mxu0 %v350
      %370 = vmatmul.f32.gmra.mxu0 %v347
      %v371 = vpop.f32.mrf.mxu0
      %v372 = vadd.f32 0.0, %v371
      %373 = vdwg.mxu0
      %374 = vmatpush.msra.mxu0 0.0
      %375 = vmatpush.msra.mxu0 0.0
      %376 = vmatpush.msra.mxu0 0.0
      %377 = vmatpush.msra.mxu0 0.0
      %378 = vmatpush.msra.mxu0 0.0
      %379 = vmatpush.msra.mxu0 0.0
      %380 = vmatpush.msra.mxu0 0.0
      %381 = vmatpush.msra.mxu0 0.0
      %382 = vmatpush.msra.mxu0 0.0
      %383 = vmatpush.msra.mxu0 0.0
      %384 = vmatpush.msra.mxu0 0.0
      %385 = vmatpush.msra.mxu0 0.0
      %386 = vmatpush.msra.mxu0 0.0
      %387 = vmatpush.msra.mxu0 0.0
      %388 = vmatpush.msra.mxu0 0.0
      %389 = vmatpush.msra.mxu0 %v352
      %390 = vmatmul.f32.gmra.mxu0 %v347
      %v391 = vpop.f32.mrf.mxu0
      %v392 = vadd.f32 0.0, %v391
      %393 = vdwg.mxu0
      %394 = vst [vmem:[#allocation1] ss:$2 sm:$0xff] %v331
      %v395 = vld.sshfl [vmem:[#allocation1] sm:$0xff pattern:$0x75316420]
      %v396 = vld.sshfl [vmem:[#allocation1 + $0x8] sm:$0xff pattern:$0x75316420]
      %v398 = vsel %vm345, %v332, 0
      %v400 = vsel %vm349, %v395, 0
      %v402 = vsel %vm349, %v396, 0
      %404 = vmatpush.msra.mxu0 0.0
      %405 = vmatpush.msra.mxu0 0.0
      %406 = vmatpush.msra.mxu0 0.0
      %407 = vmatpush.msra.mxu0 0.0
      %408 = vmatpush.msra.mxu0 0.0
      %409 = vmatpush.msra.mxu0 0.0
      %410 = vmatpush.msra.mxu0 0.0
      %411 = vmatpush.msra.mxu0 0.0
      %412 = vmatpush.msra.mxu0 0.0
      %413 = vmatpush.msra.mxu0 0.0
      %414 = vmatpush.msra.mxu0 0.0
      %415 = vmatpush.msra.mxu0 0.0
      %416 = vmatpush.msra.mxu0 0.0
      %417 = vmatpush.msra.mxu0 0.0
      %418 = vmatpush.msra.mxu0 0.0
      %419 = vmatpush.msra.mxu0 %v400
      %420 = vmatmul.f32.gmra.mxu0 %v398
      %v421 = vpop.f32.mrf.mxu0
      %v422 = vadd.f32 %v372, %v421
      %423 = vdwg.mxu0
      %424 = vmatpush.msra.mxu0 0.0
      %425 = vmatpush.msra.mxu0 0.0
      %426 = vmatpush.msra.mxu0 0.0
      %427 = vmatpush.msra.mxu0 0.0
      %428 = vmatpush.msra.mxu0 0.0
      %429 = vmatpush.msra.mxu0 0.0
      %430 = vmatpush.msra.mxu0 0.0
      %431 = vmatpush.msra.mxu0 0.0
      %432 = vmatpush.msra.mxu0 0.0
      %433 = vmatpush.msra.mxu0 0.0
      %434 = vmatpush.msra.mxu0 0.0
      %435 = vmatpush.msra.mxu0 0.0
      %436 = vmatpush.msra.mxu0 0.0
      %437 = vmatpush.msra.mxu0 0.0
      %438 = vmatpush.msra.mxu0 0.0
      %439 = vmatpush.msra.mxu0 %v402
      %440 = vmatmul.f32.gmra.mxu0 %v398
      %v441 = vpop.f32.mrf.mxu0
      %v442 = vadd.f32 %v392, %v441
      %443 = vdwg.mxu0
      %s444 = scalar_lea.vmem %s1, 8
      %v445 = vld [vmem:[%s444] sm:$0x7]
      %446 = vst [vmem:[#allocation1] ss:$2 sm:$0xff] %v331
      %v447 = vld.sshfl [vmem:[#allocation1] sm:$0xff pattern:$0x75316420]
      %v448 = vld.sshfl [vmem:[#allocation1 + $0x8] sm:$0xff pattern:$0x75316420]
      %449 = vrot.lane.b32.xlu0 %v447, 126
      %v450 = vpop.permute.xlu0 %449
      %451 = vrot.lane.b32.xlu0 %v448, 126
      %v452 = vpop.permute.xlu0 %451
      %vm453 = vcmask 1031168
      %v454 = vsel %vm453, %v450, %v452
      %v456 = vsel %vm345, %v445, 0
      %v458 = vsel %vm349, %v454, 0
      %v460 = vsel %vm349, %v452, 0
      %462 = vmatpush.msra.mxu0 0.0
      %463 = vmatpush.msra.mxu0 0.0
      %464 = vmatpush.msra.mxu0 0.0
      %465 = vmatpush.msra.mxu0 0.0
      %466 = vmatpush.msra.mxu0 0.0
      %467 = vmatpush.msra.mxu0 0.0
      %468 = vmatpush.msra.mxu0 0.0
      %469 = vmatpush.msra.mxu0 0.0
      %470 = vmatpush.msra.mxu0 0.0
      %471 = vmatpush.msra.mxu0 0.0
      %472 = vmatpush.msra.mxu0 0.0
      %473 = vmatpush.msra.mxu0 0.0
      %474 = vmatpush.msra.mxu0 0.0
      %475 = vmatpush.msra.mxu0 0.0
      %476 = vmatpush.msra.mxu0 0.0
      %477 = vmatpush.msra.mxu0 %v458
      %478 = vmatmul.f32.gmra.mxu0 %v456
      %v479 = vpop.f32.mrf.mxu0
      %v480 = vadd.f32 0.0, %v479
      %481 = vdwg.mxu0
      %482 = vmatpush.msra.mxu0 0.0
      %483 = vmatpush.msra.mxu0 0.0
      %484 = vmatpush.msra.mxu0 0.0
      %485 = vmatpush.msra.mxu0 0.0
      %486 = vmatpush.msra.mxu0 0.0
      %487 = vmatpush.msra.mxu0 0.0
      %488 = vmatpush.msra.mxu0 0.0
      %489 = vmatpush.msra.mxu0 0.0
      %490 = vmatpush.msra.mxu0 0.0
      %491 = vmatpush.msra.mxu0 0.0
      %492 = vmatpush.msra.mxu0 0.0
      %493 = vmatpush.msra.mxu0 0.0
      %494 = vmatpush.msra.mxu0 0.0
      %495 = vmatpush.msra.mxu0 0.0
      %496 = vmatpush.msra.mxu0 0.0
      %497 = vmatpush.msra.mxu0 %v460
      %498 = vmatmul.f32.gmra.mxu0 %v456
      %v499 = vpop.f32.mrf.mxu0
      %v500 = vadd.f32 0.0, %v499
      %501 = vdwg.mxu0
      %v502 = vadd.f32 %v422, %v480
      %v503 = vadd.f32 %v442, %v500
      %s504 = scalar_lea.vmem %s1, 12
      %v505 = vld [vmem:[%s504] sm:$0x7]
      %506 = vst [vmem:[#allocation1] ss:$2 sm:$0xff] %v331
      %v507 = vld.sshfl [vmem:[#allocation1] sm:$0xff pattern:$0x75316420]
      %v508 = vld.sshfl [vmem:[#allocation1 + $0x8] sm:$0xff pattern:$0x75316420]
      %509 = vrot.lane.b32.xlu0 %v507, 112
      %v510 = vpop.permute.xlu0 %509
      %511 = vrot.lane.b32.xlu0 %v508, 112
      %v512 = vpop.permute.xlu0 %511
      %vm513 = vcmask 916480
      %v514 = vsel %vm513, %v510, %v512
      %v516 = vsel %vm345, %v505, 0
      %v518 = vsel %vm349, %v514, 0
      %v520 = vsel %vm349, %v512, 0
      %522 = vmatpush.msra.mxu0 0.0
      %523 = vmatpush.msra.mxu0 0.0
      %524 = vmatpush.msra.mxu0 0.0
      %525 = vmatpush.msra.mxu0 0.0
      %526 = vmatpush.msra.mxu0 0.0
      %527 = vmatpush.msra.mxu0 0.0
      %528 = vmatpush.msra.mxu0 0.0
      %529 = vmatpush.msra.mxu0 0.0
      %530 = vmatpush.msra.mxu0 0.0
      %531 = vmatpush.msra.mxu0 0.0
      %532 = vmatpush.msra.mxu0 0.0
      %533 = vmatpush.msra.mxu0 0.0
      %534 = vmatpush.msra.mxu0 0.0
      %535 = vmatpush.msra.mxu0 0.0
      %536 = vmatpush.msra.mxu0 0.0
      %537 = vmatpush.msra.mxu0 %v518
      %538 = vmatmul.f32.gmra.mxu0 %v516
      %v539 = vpop.f32.mrf.mxu0
      %v540 = vadd.f32 0.0, %v539
      %541 = vdwg.mxu0
      %542 = vmatpush.msra.mxu0 0.0
      %543 = vmatpush.msra.mxu0 0.0
      %544 = vmatpush.msra.mxu0 0.0
      %545 = vmatpush.msra.mxu0 0.0
      %546 = vmatpush.msra.mxu0 0.0
      %547 = vmatpush.msra.mxu0 0.0
      %548 = vmatpush.msra.mxu0 0.0
      %549 = vmatpush.msra.mxu0 0.0
      %550 = vmatpush.msra.mxu0 0.0
      %551 = vmatpush.msra.mxu0 0.0
      %552 = vmatpush.msra.mxu0 0.0
      %553 = vmatpush.msra.mxu0 0.0
      %554 = vmatpush.msra.mxu0 0.0
      %555 = vmatpush.msra.mxu0 0.0
      %556 = vmatpush.msra.mxu0 0.0
      %557 = vmatpush.msra.mxu0 %v520
      %558 = vmatmul.f32.gmra.mxu0 %v516
      %v559 = vpop.f32.mrf.mxu0
      %v560 = vadd.f32 0.0, %v559
      %561 = vdwg.mxu0
      %v562 = vadd.f32 %v502, %v540
      %v563 = vadd.f32 %v503, %v560
      %s564 = scalar_lea.vmem %s1, 16
      %v565 = vld [vmem:[%s564] sm:$0x7]
      %566 = vst [vmem:[#allocation1] ss:$2 sm:$0xff] %v331
      %v567 = vld.sshfl [vmem:[#allocation1] sm:$0xff pattern:$0x75316420]
      %v568 = vld.sshfl [vmem:[#allocation1 + $0x8] sm:$0xff pattern:$0x75316420]
      %569 = vrot.lane.b32.xlu0 %v567, 111
      %v570 = vpop.permute.xlu0 %569
      %571 = vrot.lane.b32.xlu0 %v568, 111
      %v572 = vpop.permute.xlu0 %571
      %vm573 = vcmask 908288
      %v574 = vsel %vm573, %v570, %v572
      %v576 = vsel %vm345, %v565, 0
      %v578 = vsel %vm349, %v574, 0
      %v580 = vsel %vm349, %v572, 0
      %582 = vmatpush.msra.mxu0 0.0
      %583 = vmatpush.msra.mxu0 0.0
      %584 = vmatpush.msra.mxu0 0.0
      %585 = vmatpush.msra.mxu0 0.0
      %586 = vmatpush.msra.mxu0 0.0
      %587 = vmatpush.msra.mxu0 0.0
      %588 = vmatpush.msra.mxu0 0.0
      %589 = vmatpush.msra.mxu0 0.0
      %590 = vmatpush.msra.mxu0 0.0
      %591 = vmatpush.msra.mxu0 0.0
      %592 = vmatpush.msra.mxu0 0.0
      %593 = vmatpush.msra.mxu0 0.0
      %594 = vmatpush.msra.mxu0 0.0
      %595 = vmatpush.msra.mxu0 0.0
      %596 = vmatpush.msra.mxu0 0.0
      %597 = vmatpush.msra.mxu0 %v578
      %598 = vmatmul.f32.gmra.mxu0 %v576
      %v599 = vpop.f32.mrf.mxu0
      %v600 = vadd.f32 0.0, %v599
      %601 = vdwg.mxu0
      %602 = vmatpush.msra.mxu0 0.0
      %603 = vmatpush.msra.mxu0 0.0
      %604 = vmatpush.msra.mxu0 0.0
      %605 = vmatpush.msra.mxu0 0.0
      %606 = vmatpush.msra.mxu0 0.0
      %607 = vmatpush.msra.mxu0 0.0
      %608 = vmatpush.msra.mxu0 0.0
      %609 = vmatpush.msra.mxu0 0.0
      %610 = vmatpush.msra.mxu0 0.0
      %611 = vmatpush.msra.mxu0 0.0
      %612 = vmatpush.msra.mxu0 0.0
      %613 = vmatpush.msra.mxu0 0.0
      %614 = vmatpush.msra.mxu0 0.0
      %615 = vmatpush.msra.mxu0 0.0
      %616 = vmatpush.msra.mxu0 0.0
      %617 = vmatpush.msra.mxu0 %v580
      %618 = vmatmul.f32.gmra.mxu0 %v576
      %v619 = vpop.f32.mrf.mxu0
      %v620 = vadd.f32 0.0, %v619
      %621 = vdwg.mxu0
      %v622 = vadd.f32 %v562, %v600
      %v623 = vadd.f32 %v563, %v620
      %s624 = scalar_lea.vmem %s1, 20
      %v625 = vld [vmem:[%s624] sm:$0x7]
      %626 = vst [vmem:[#allocation1] ss:$2 sm:$0xff] %v331
      %v627 = vld.sshfl [vmem:[#allocation1] sm:$0xff pattern:$0x75316420]
      %v628 = vld.sshfl [vmem:[#allocation1 + $0x8] sm:$0xff pattern:$0x75316420]
      %629 = vrot.lane.b32.xlu0 %v627, 110
      %v630 = vpop.permute.xlu0 %629
      %631 = vrot.lane.b32.xlu0 %v628, 110
      %v632 = vpop.permute.xlu0 %631
      %vm633 = vcmask 900096
      %v634 = vsel %vm633, %v630, %v632
      %v636 = vsel %vm345, %v625, 0
      %v638 = vsel %vm349, %v634, 0
      %v640 = vsel %vm349, %v632, 0
      %642 = vmatpush.msra.mxu0 0.0
      %643 = vmatpush.msra.mxu0 0.0
      %644 = vmatpush.msra.mxu0 0.0
      %645 = vmatpush.msra.mxu0 0.0
      %646 = vmatpush.msra.mxu0 0.0
      %647 = vmatpush.msra.mxu0 0.0
      %648 = vmatpush.msra.mxu0 0.0
      %649 = vmatpush.msra.mxu0 0.0
      %650 = vmatpush.msra.mxu0 0.0
      %651 = vmatpush.msra.mxu0 0.0
      %652 = vmatpush.msra.mxu0 0.0
      %653 = vmatpush.msra.mxu0 0.0
      %654 = vmatpush.msra.mxu0 0.0
      %655 = vmatpush.msra.mxu0 0.0
      %656 = vmatpush.msra.mxu0 0.0
      %657 = vmatpush.msra.mxu0 %v638
      %658 = vmatmul.f32.gmra.mxu0 %v636
      %v659 = vpop.f32.mrf.mxu0
      %v660 = vadd.f32 0.0, %v659
      %661 = vdwg.mxu0
      %662 = vmatpush.msra.mxu0 0.0
      %663 = vmatpush.msra.mxu0 0.0
      %664 = vmatpush.msra.mxu0 0.0
      %665 = vmatpush.msra.mxu0 0.0
      %666 = vmatpush.msra.mxu0 0.0
      %667 = vmatpush.msra.mxu0 0.0
      %668 = vmatpush.msra.mxu0 0.0
      %669 = vmatpush.msra.mxu0 0.0
      %670 = vmatpush.msra.mxu0 0.0
      %671 = vmatpush.msra.mxu0 0.0
      %672 = vmatpush.msra.mxu0 0.0
      %673 = vmatpush.msra.mxu0 0.0
      %674 = vmatpush.msra.mxu0 0.0
      %675 = vmatpush.msra.mxu0 0.0
      %676 = vmatpush.msra.mxu0 0.0
      %677 = vmatpush.msra.mxu0 %v640
      %678 = vmatmul.f32.gmra.mxu0 %v636
      %v679 = vpop.f32.mrf.mxu0
      %v680 = vadd.f32 0.0, %v679
      %681 = vdwg.mxu0
      %v682 = vadd.f32 %v622, %v660
      %v683 = vadd.f32 %v623, %v680
      %s684 = scalar_lea.vmem %s1, 24
      %v685 = vld [vmem:[%s684] sm:$0x7]
      %686 = vst [vmem:[#allocation1] ss:$2 sm:$0xff] %v331
      %v687 = vld.sshfl [vmem:[#allocation1] sm:$0xff pattern:$0x75316420]
      %v688 = vld.sshfl [vmem:[#allocation1 + $0x8] sm:$0xff pattern:$0x75316420]
      %689 = vrot.lane.b32.xlu0 %v687, 96
      %v690 = vpop.permute.xlu0 %689
      %691 = vrot.lane.b32.xlu0 %v688, 96
      %v692 = vpop.permute.xlu0 %691
      %vm693 = vcmask 785408
      %v694 = vsel %vm693, %v690, %v692
      %v696 = vsel %vm345, %v685, 0
      %v698 = vsel %vm349, %v694, 0
      %v700 = vsel %vm349, %v692, 0
      %702 = vmatpush.msra.mxu0 0.0
      %703 = vmatpush.msra.mxu0 0.0
      %704 = vmatpush.msra.mxu0 0.0
      %705 = vmatpush.msra.mxu0 0.0
      %706 = vmatpush.msra.mxu0 0.0
      %707 = vmatpush.msra.mxu0 0.0
      %708 = vmatpush.msra.mxu0 0.0
      %709 = vmatpush.msra.mxu0 0.0
      %710 = vmatpush.msra.mxu0 0.0
      %711 = vmatpush.msra.mxu0 0.0
      %712 = vmatpush.msra.mxu0 0.0
      %713 = vmatpush.msra.mxu0 0.0
      %714 = vmatpush.msra.mxu0 0.0
      %715 = vmatpush.msra.mxu0 0.0
      %716 = vmatpush.msra.mxu0 0.0
      %717 = vmatpush.msra.mxu0 %v698
      %718 = vmatmul.f32.gmra.mxu0 %v696
      %v719 = vpop.f32.mrf.mxu0
      %v720 = vadd.f32 0.0, %v719
      %721 = vdwg.mxu0
      %722 = vmatpush.msra.mxu0 0.0
      %723 = vmatpush.msra.mxu0 0.0
      %724 = vmatpush.msra.mxu0 0.0
      %725 = vmatpush.msra.mxu0 0.0
      %726 = vmatpush.msra.mxu0 0.0
      %727 = vmatpush.msra.mxu0 0.0
      %728 = vmatpush.msra.mxu0 0.0
      %729 = vmatpush.msra.mxu0 0.0
      %730 = vmatpush.msra.mxu0 0.0
      %731 = vmatpush.msra.mxu0 0.0
      %732 = vmatpush.msra.mxu0 0.0
      %733 = vmatpush.msra.mxu0 0.0
      %734 = vmatpush.msra.mxu0 0.0
      %735 = vmatpush.msra.mxu0 0.0
      %736 = vmatpush.msra.mxu0 0.0
      %737 = vmatpush.msra.mxu0 %v700
      %738 = vmatmul.f32.gmra.mxu0 %v696
      %v739 = vpop.f32.mrf.mxu0
      %v740 = vadd.f32 0.0, %v739
      %741 = vdwg.mxu0
      %v742 = vadd.f32 %v682, %v720
      %v743 = vadd.f32 %v683, %v740
      %s744 = scalar_lea.vmem %s1, 28
      %v745 = vld [vmem:[%s744] sm:$0x7]
      %746 = vst [vmem:[#allocation1] ss:$2 sm:$0xff] %v331
      %v747 = vld.sshfl [vmem:[#allocation1] sm:$0xff pattern:$0x75316420]
      %v748 = vld.sshfl [vmem:[#allocation1 + $0x8] sm:$0xff pattern:$0x75316420]
      %749 = vrot.lane.b32.xlu0 %v747, 95
      %v750 = vpop.permute.xlu0 %749
      %751 = vrot.lane.b32.xlu0 %v748, 95
      %v752 = vpop.permute.xlu0 %751
      %vm753 = vcmask 777216
      %v754 = vsel %vm753, %v750, %v752
      %v756 = vsel %vm345, %v745, 0
      %v758 = vsel %vm349, %v754, 0
      %v760 = vsel %vm349, %v752, 0
      %762 = vmatpush.msra.mxu0 0.0
      %763 = vmatpush.msra.mxu0 0.0
      %764 = vmatpush.msra.mxu0 0.0
      %765 = vmatpush.msra.mxu0 0.0
      %766 = vmatpush.msra.mxu0 0.0
      %767 = vmatpush.msra.mxu0 0.0
      %768 = vmatpush.msra.mxu0 0.0
      %769 = vmatpush.msra.mxu0 0.0
      %770 = vmatpush.msra.mxu0 0.0
      %771 = vmatpush.msra.mxu0 0.0
      %772 = vmatpush.msra.mxu0 0.0
      %773 = vmatpush.msra.mxu0 0.0
      %774 = vmatpush.msra.mxu0 0.0
      %775 = vmatpush.msra.mxu0 0.0
      %776 = vmatpush.msra.mxu0 0.0
      %777 = vmatpush.msra.mxu0 %v758
      %778 = vmatmul.f32.gmra.mxu0 %v756
      %v779 = vpop.f32.mrf.mxu0
      %v780 = vadd.f32 0.0, %v779
      %781 = vdwg.mxu0
      %782 = vmatpush.msra.mxu0 0.0
      %783 = vmatpush.msra.mxu0 0.0
      %784 = vmatpush.msra.mxu0 0.0
      %785 = vmatpush.msra.mxu0 0.0
      %786 = vmatpush.msra.mxu0 0.0
      %787 = vmatpush.msra.mxu0 0.0
      %788 = vmatpush.msra.mxu0 0.0
      %789 = vmatpush.msra.mxu0 0.0
      %790 = vmatpush.msra.mxu0 0.0
      %791 = vmatpush.msra.mxu0 0.0
      %792 = vmatpush.msra.mxu0 0.0
      %793 = vmatpush.msra.mxu0 0.0
      %794 = vmatpush.msra.mxu0 0.0
      %795 = vmatpush.msra.mxu0 0.0
      %796 = vmatpush.msra.mxu0 0.0
      %797 = vmatpush.msra.mxu0 %v760
      %798 = vmatmul.f32.gmra.mxu0 %v756
      %v799 = vpop.f32.mrf.mxu0
      %v800 = vadd.f32 0.0, %v799
      %801 = vdwg.mxu0
      %v802 = vadd.f32 %v742, %v780
      %v803 = vadd.f32 %v743, %v800
      %s804 = scalar_lea.vmem %s1, 32
      %v805 = vld [vmem:[%s804] sm:$0x7]
      %806 = vst [vmem:[#allocation1] ss:$2 sm:$0xff] %v331
      %v807 = vld.sshfl [vmem:[#allocation1] sm:$0xff pattern:$0x75316420]
      %v808 = vld.sshfl [vmem:[#allocation1 + $0x8] sm:$0xff pattern:$0x75316420]
      %809 = vrot.lane.b32.xlu0 %v807, 94
      %v810 = vpop.permute.xlu0 %809
      %811 = vrot.lane.b32.xlu0 %v808, 94
      %v812 = vpop.permute.xlu0 %811
      %vm813 = vcmask 769024
      %v814 = vsel %vm813, %v810, %v812
      %v816 = vsel %vm345, %v805, 0
      %v818 = vsel %vm349, %v814, 0
      %v820 = vsel %vm349, %v812, 0
      %822 = vmatpush.msra.mxu0 0.0
      %823 = vmatpush.msra.mxu0 0.0
      %824 = vmatpush.msra.mxu0 0.0
      %825 = vmatpush.msra.mxu0 0.0
      %826 = vmatpush.msra.mxu0 0.0
      %827 = vmatpush.msra.mxu0 0.0
      %828 = vmatpush.msra.mxu0 0.0
      %829 = vmatpush.msra.mxu0 0.0
      %830 = vmatpush.msra.mxu0 0.0
      %831 = vmatpush.msra.mxu0 0.0
      %832 = vmatpush.msra.mxu0 0.0
      %833 = vmatpush.msra.mxu0 0.0
      %834 = vmatpush.msra.mxu0 0.0
      %835 = vmatpush.msra.mxu0 0.0
      %836 = vmatpush.msra.mxu0 0.0
      %837 = vmatpush.msra.mxu0 %v818
      %838 = vmatmul.f32.gmra.mxu0 %v816
      %v839 = vpop.f32.mrf.mxu0
      %v840 = vadd.f32 0.0, %v839
      %841 = vdwg.mxu0
      %842 = vmatpush.msra.mxu0 0.0
      %843 = vmatpush.msra.mxu0 0.0
      %844 = vmatpush.msra.mxu0 0.0
      %845 = vmatpush.msra.mxu0 0.0
      %846 = vmatpush.msra.mxu0 0.0
      %847 = vmatpush.msra.mxu0 0.0
      %848 = vmatpush.msra.mxu0 0.0
      %849 = vmatpush.msra.mxu0 0.0
      %850 = vmatpush.msra.mxu0 0.0
      %851 = vmatpush.msra.mxu0 0.0
      %852 = vmatpush.msra.mxu0 0.0
      %853 = vmatpush.msra.mxu0 0.0
      %854 = vmatpush.msra.mxu0 0.0
      %855 = vmatpush.msra.mxu0 0.0
      %856 = vmatpush.msra.mxu0 0.0
      %857 = vmatpush.msra.mxu0 %v820
      %858 = vmatmul.f32.gmra.mxu0 %v816
      %v859 = vpop.f32.mrf.mxu0
      %v860 = vadd.f32 0.0, %v859
      %861 = vdwg.mxu0
      %v862 = vadd.f32 %v802, %v840
      %v863 = vadd.f32 %v803, %v860
      %v864 = vld [vmem:[%s2] sm:$0x7]
      %866 = vset.pattern.permute.xlu0 0
      %867 = vperm.xlu0 %866, %v864
      %v868 = vpop.permute.xlu0 %867
      %v870 = vadd.f32 %v862, %v868
      %v871 = vadd.f32 %v863, %v868
      %v872 = vld [vmem:[%s3] sm:$0x7]
      %s873 = scalar_lea.vmem %s3, 4
      %v874 = vld [vmem:[%s873] sm:$0x7]
      %877 = vrot.lane.b32.xlu0 %v870, 127
      %v878 = vpop.permute.xlu0 %877
      %879 = vrot.lane.b32.xlu0 %v871, 127
      %v880 = vpop.permute.xlu0 %879
      %v881 = vsel %vm343, %v878, %v880
      %v883 = vsel %vm345, %v874, 0
      %v885 = vsel %vm349, %v881, 0
      %v887 = vsel %vm349, %v880, 0
      %889 = vmatpush.msra.mxu0 0.0
      %890 = vmatpush.msra.mxu0 0.0
      %891 = vmatpush.msra.mxu0 0.0
      %892 = vmatpush.msra.mxu0 0.0
      %893 = vmatpush.msra.mxu0 0.0
      %894 = vmatpush.msra.mxu0 0.0
      %895 = vmatpush.msra.mxu0 0.0
      %896 = vmatpush.msra.mxu0 0.0
      %897 = vmatpush.msra.mxu0 0.0
      %898 = vmatpush.msra.mxu0 0.0
      %899 = vmatpush.msra.mxu0 0.0
      %900 = vmatpush.msra.mxu0 0.0
      %901 = vmatpush.msra.mxu0 0.0
      %902 = vmatpush.msra.mxu0 0.0
      %903 = vmatpush.msra.mxu0 0.0
      %904 = vmatpush.msra.mxu0 %v885
      %905 = vmatmul.f32.gmra.mxu0 %v883
      %v906 = vpop.f32.mrf.mxu0
      %v907 = vadd.f32 0.0, %v906
      %908 = vdwg.mxu0
      %909 = vmatpush.msra.mxu0 0.0
      %910 = vmatpush.msra.mxu0 0.0
      %911 = vmatpush.msra.mxu0 0.0
      %912 = vmatpush.msra.mxu0 0.0
      %913 = vmatpush.msra.mxu0 0.0
      %914 = vmatpush.msra.mxu0 0.0
      %915 = vmatpush.msra.mxu0 0.0
      %916 = vmatpush.msra.mxu0 0.0
      %917 = vmatpush.msra.mxu0 0.0
      %918 = vmatpush.msra.mxu0 0.0
      %919 = vmatpush.msra.mxu0 0.0
      %920 = vmatpush.msra.mxu0 0.0
      %921 = vmatpush.msra.mxu0 0.0
      %922 = vmatpush.msra.mxu0 0.0
      %923 = vmatpush.msra.mxu0 0.0
      %924 = vmatpush.msra.mxu0 %v887
      %925 = vmatmul.f32.gmra.mxu0 %v883
      %v926 = vpop.f32.mrf.mxu0
      %v927 = vadd.f32 0.0, %v926
      %928 = vdwg.mxu0
      %v930 = vsel %vm345, %v872, 0
      %v932 = vsel %vm349, %v870, 0
      %v934 = vsel %vm349, %v871, 0
      %936 = vmatpush.msra.mxu0 0.0
      %937 = vmatpush.msra.mxu0 0.0
      %938 = vmatpush.msra.mxu0 0.0
      %939 = vmatpush.msra.mxu0 0.0
      %940 = vmatpush.msra.mxu0 0.0
      %941 = vmatpush.msra.mxu0 0.0
      %942 = vmatpush.msra.mxu0 0.0
      %943 = vmatpush.msra.mxu0 0.0
      %944 = vmatpush.msra.mxu0 0.0
      %945 = vmatpush.msra.mxu0 0.0
      %946 = vmatpush.msra.mxu0 0.0
      %947 = vmatpush.msra.mxu0 0.0
      %948 = vmatpush.msra.mxu0 0.0
      %949 = vmatpush.msra.mxu0 0.0
      %950 = vmatpush.msra.mxu0 0.0
      %951 = vmatpush.msra.mxu0 %v932
      %952 = vmatmul.f32.gmra.mxu0 %v930
      %v953 = vpop.f32.mrf.mxu0
      %v954 = vadd.f32 %v907, %v953
      %955 = vdwg.mxu0
      %956 = vmatpush.msra.mxu0 0.0
      %957 = vmatpush.msra.mxu0 0.0
      %958 = vmatpush.msra.mxu0 0.0
      %959 = vmatpush.msra.mxu0 0.0
      %960 = vmatpush.msra.mxu0 0.0
      %961 = vmatpush.msra.mxu0 0.0
      %962 = vmatpush.msra.mxu0 0.0
      %963 = vmatpush.msra.mxu0 0.0
      %964 = vmatpush.msra.mxu0 0.0
      %965 = vmatpush.msra.mxu0 0.0
      %966 = vmatpush.msra.mxu0 0.0
      %967 = vmatpush.msra.mxu0 0.0
      %968 = vmatpush.msra.mxu0 0.0
      %969 = vmatpush.msra.mxu0 0.0
      %970 = vmatpush.msra.mxu0 0.0
      %971 = vmatpush.msra.mxu0 %v934
      %972 = vmatmul.f32.gmra.mxu0 %v930
      %v973 = vpop.f32.mrf.mxu0
      %v974 = vadd.f32 %v927, %v973
      %975 = vdwg.mxu0
      %s976 = scalar_lea.vmem %s3, 8
      %v977 = vld [vmem:[%s976] sm:$0x7]
      %978 = vrot.lane.b32.xlu0 %v870, 126
      %v979 = vpop.permute.xlu0 %978
      %980 = vrot.lane.b32.xlu0 %v871, 126
      %v981 = vpop.permute.xlu0 %980
      %v982 = vsel %vm453, %v979, %v981
      %v984 = vsel %vm345, %v977, 0
      %v986 = vsel %vm349, %v982, 0
      %v988 = vsel %vm349, %v981, 0
      %990 = vmatpush.msra.mxu0 0.0
      %991 = vmatpush.msra.mxu0 0.0
      %992 = vmatpush.msra.mxu0 0.0
      %993 = vmatpush.msra.mxu0 0.0
      %994 = vmatpush.msra.mxu0 0.0
      %995 = vmatpush.msra.mxu0 0.0
      %996 = vmatpush.msra.mxu0 0.0
      %997 = vmatpush.msra.mxu0 0.0
      %998 = vmatpush.msra.mxu0 0.0
      %999 = vmatpush.msra.mxu0 0.0
      %1000 = vmatpush.msra.mxu0 0.0
      %1001 = vmatpush.msra.mxu0 0.0
      %1002 = vmatpush.msra.mxu0 0.0
      %1003 = vmatpush.msra.mxu0 0.0
      %1004 = vmatpush.msra.mxu0 0.0
      %1005 = vmatpush.msra.mxu0 %v986
      %1006 = vmatmul.f32.gmra.mxu0 %v984
      %v1007 = vpop.f32.mrf.mxu0
      %v1008 = vadd.f32 0.0, %v1007
      %1009 = vdwg.mxu0
      %1010 = vmatpush.msra.mxu0 0.0
      %1011 = vmatpush.msra.mxu0 0.0
      %1012 = vmatpush.msra.mxu0 0.0
      %1013 = vmatpush.msra.mxu0 0.0
      %1014 = vmatpush.msra.mxu0 0.0
      %1015 = vmatpush.msra.mxu0 0.0
      %1016 = vmatpush.msra.mxu0 0.0
      %1017 = vmatpush.msra.mxu0 0.0
      %1018 = vmatpush.msra.mxu0 0.0
      %1019 = vmatpush.msra.mxu0 0.0
      %1020 = vmatpush.msra.mxu0 0.0
      %1021 = vmatpush.msra.mxu0 0.0
      %1022 = vmatpush.msra.mxu0 0.0
      %1023 = vmatpush.msra.mxu0 0.0
      %1024 = vmatpush.msra.mxu0 0.0
      %1025 = vmatpush.msra.mxu0 %v988
      %1026 = vmatmul.f32.gmra.mxu0 %v984
      %v1027 = vpop.f32.mrf.mxu0
      %v1028 = vadd.f32 0.0, %v1027
      %1029 = vdwg.mxu0
      %v1030 = vadd.f32 %v954, %v1008
      %v1031 = vadd.f32 %v974, %v1028
      %s1032 = scalar_lea.vmem %s3, 12
      %v1033 = vld [vmem:[%s1032] sm:$0x7]
      %1034 = vrot.lane.b32.xlu0 %v870, 112
      %v1035 = vpop.permute.xlu0 %1034
      %1036 = vrot.lane.b32.xlu0 %v871, 112
      %v1037 = vpop.permute.xlu0 %1036
      %v1038 = vsel %vm513, %v1035, %v1037
      %v1040 = vsel %vm345, %v1033, 0
      %v1042 = vsel %vm349, %v1038, 0
      %v1044 = vsel %vm349, %v1037, 0
      %1046 = vmatpush.msra.mxu0 0.0
      %1047 = vmatpush.msra.mxu0 0.0
      %1048 = vmatpush.msra.mxu0 0.0
      %1049 = vmatpush.msra.mxu0 0.0
      %1050 = vmatpush.msra.mxu0 0.0
      %1051 = vmatpush.msra.mxu0 0.0
      %1052 = vmatpush.msra.mxu0 0.0
      %1053 = vmatpush.msra.mxu0 0.0
      %1054 = vmatpush.msra.mxu0 0.0
      %1055 = vmatpush.msra.mxu0 0.0
      %1056 = vmatpush.msra.mxu0 0.0
      %1057 = vmatpush.msra.mxu0 0.0
      %1058 = vmatpush.msra.mxu0 0.0
      %1059 = vmatpush.msra.mxu0 0.0
      %1060 = vmatpush.msra.mxu0 0.0
      %1061 = vmatpush.msra.mxu0 %v1042
      %1062 = vmatmul.f32.gmra.mxu0 %v1040
      %v1063 = vpop.f32.mrf.mxu0
      %v1064 = vadd.f32 0.0, %v1063
      %1065 = vdwg.mxu0
      %1066 = vmatpush.msra.mxu0 0.0
      %1067 = vmatpush.msra.mxu0 0.0
      %1068 = vmatpush.msra.mxu0 0.0
      %1069 = vmatpush.msra.mxu0 0.0
      %1070 = vmatpush.msra.mxu0 0.0
      %1071 = vmatpush.msra.mxu0 0.0
      %1072 = vmatpush.msra.mxu0 0.0
      %1073 = vmatpush.msra.mxu0 0.0
      %1074 = vmatpush.msra.mxu0 0.0
      %1075 = vmatpush.msra.mxu0 0.0
      %1076 = vmatpush.msra.mxu0 0.0
      %1077 = vmatpush.msra.mxu0 0.0
      %1078 = vmatpush.msra.mxu0 0.0
      %1079 = vmatpush.msra.mxu0 0.0
      %1080 = vmatpush.msra.mxu0 0.0
      %1081 = vmatpush.msra.mxu0 %v1044
      %1082 = vmatmul.f32.gmra.mxu0 %v1040
      %v1083 = vpop.f32.mrf.mxu0
      %v1084 = vadd.f32 0.0, %v1083
      %1085 = vdwg.mxu0
      %v1086 = vadd.f32 %v1030, %v1064
      %v1087 = vadd.f32 %v1031, %v1084
      %s1088 = scalar_lea.vmem %s3, 16
      %v1089 = vld [vmem:[%s1088] sm:$0x7]
      %1090 = vrot.lane.b32.xlu0 %v870, 111
      %v1091 = vpop.permute.xlu0 %1090
      %1092 = vrot.lane.b32.xlu0 %v871, 111
      %v1093 = vpop.permute.xlu0 %1092
      %v1094 = vsel %vm573, %v1091, %v1093
      %v1096 = vsel %vm345, %v1089, 0
      %v1098 = vsel %vm349, %v1094, 0
      %v1100 = vsel %vm349, %v1093, 0
      %1102 = vmatpush.msra.mxu0 0.0
      %1103 = vmatpush.msra.mxu0 0.0
      %1104 = vmatpush.msra.mxu0 0.0
      %1105 = vmatpush.msra.mxu0 0.0
      %1106 = vmatpush.msra.mxu0 0.0
      %1107 = vmatpush.msra.mxu0 0.0
      %1108 = vmatpush.msra.mxu0 0.0
      %1109 = vmatpush.msra.mxu0 0.0
      %1110 = vmatpush.msra.mxu0 0.0
      %1111 = vmatpush.msra.mxu0 0.0
      %1112 = vmatpush.msra.mxu0 0.0
      %1113 = vmatpush.msra.mxu0 0.0
      %1114 = vmatpush.msra.mxu0 0.0
      %1115 = vmatpush.msra.mxu0 0.0
      %1116 = vmatpush.msra.mxu0 0.0
      %1117 = vmatpush.msra.mxu0 %v1098
      %1118 = vmatmul.f32.gmra.mxu0 %v1096
      %v1119 = vpop.f32.mrf.mxu0
      %v1120 = vadd.f32 0.0, %v1119
      %1121 = vdwg.mxu0
      %1122 = vmatpush.msra.mxu0 0.0
      %1123 = vmatpush.msra.mxu0 0.0
      %1124 = vmatpush.msra.mxu0 0.0
      %1125 = vmatpush.msra.mxu0 0.0
      %1126 = vmatpush.msra.mxu0 0.0
      %1127 = vmatpush.msra.mxu0 0.0
      %1128 = vmatpush.msra.mxu0 0.0
      %1129 = vmatpush.msra.mxu0 0.0
      %1130 = vmatpush.msra.mxu0 0.0
      %1131 = vmatpush.msra.mxu0 0.0
      %1132 = vmatpush.msra.mxu0 0.0
      %1133 = vmatpush.msra.mxu0 0.0
      %1134 = vmatpush.msra.mxu0 0.0
      %1135 = vmatpush.msra.mxu0 0.0
      %1136 = vmatpush.msra.mxu0 0.0
      %1137 = vmatpush.msra.mxu0 %v1100
      %1138 = vmatmul.f32.gmra.mxu0 %v1096
      %v1139 = vpop.f32.mrf.mxu0
      %v1140 = vadd.f32 0.0, %v1139
      %1141 = vdwg.mxu0
      %v1142 = vadd.f32 %v1086, %v1120
      %v1143 = vadd.f32 %v1087, %v1140
      %s1144 = scalar_lea.vmem %s3, 20
      %v1145 = vld [vmem:[%s1144] sm:$0x7]
      %1146 = vrot.lane.b32.xlu0 %v870, 110
      %v1147 = vpop.permute.xlu0 %1146
      %1148 = vrot.lane.b32.xlu0 %v871, 110
      %v1149 = vpop.permute.xlu0 %1148
      %v1150 = vsel %vm633, %v1147, %v1149
      %v1152 = vsel %vm345, %v1145, 0
      %v1154 = vsel %vm349, %v1150, 0
      %v1156 = vsel %vm349, %v1149, 0
      %1158 = vmatpush.msra.mxu0 0.0
      %1159 = vmatpush.msra.mxu0 0.0
      %1160 = vmatpush.msra.mxu0 0.0
      %1161 = vmatpush.msra.mxu0 0.0
      %1162 = vmatpush.msra.mxu0 0.0
      %1163 = vmatpush.msra.mxu0 0.0
      %1164 = vmatpush.msra.mxu0 0.0
      %1165 = vmatpush.msra.mxu0 0.0
      %1166 = vmatpush.msra.mxu0 0.0
      %1167 = vmatpush.msra.mxu0 0.0
      %1168 = vmatpush.msra.mxu0 0.0
      %1169 = vmatpush.msra.mxu0 0.0
      %1170 = vmatpush.msra.mxu0 0.0
      %1171 = vmatpush.msra.mxu0 0.0
      %1172 = vmatpush.msra.mxu0 0.0
      %1173 = vmatpush.msra.mxu0 %v1154
      %1174 = vmatmul.f32.gmra.mxu0 %v1152
      %v1175 = vpop.f32.mrf.mxu0
      %v1176 = vadd.f32 0.0, %v1175
      %1177 = vdwg.mxu0
      %1178 = vmatpush.msra.mxu0 0.0
      %1179 = vmatpush.msra.mxu0 0.0
      %1180 = vmatpush.msra.mxu0 0.0
      %1181 = vmatpush.msra.mxu0 0.0
      %1182 = vmatpush.msra.mxu0 0.0
      %1183 = vmatpush.msra.mxu0 0.0
      %1184 = vmatpush.msra.mxu0 0.0
      %1185 = vmatpush.msra.mxu0 0.0
      %1186 = vmatpush.msra.mxu0 0.0
      %1187 = vmatpush.msra.mxu0 0.0
      %1188 = vmatpush.msra.mxu0 0.0
      %1189 = vmatpush.msra.mxu0 0.0
      %1190 = vmatpush.msra.mxu0 0.0
      %1191 = vmatpush.msra.mxu0 0.0
      %1192 = vmatpush.msra.mxu0 0.0
      %1193 = vmatpush.msra.mxu0 %v1156
      %1194 = vmatmul.f32.gmra.mxu0 %v1152
      %v1195 = vpop.f32.mrf.mxu0
      %v1196 = vadd.f32 0.0, %v1195
      %1197 = vdwg.mxu0
      %v1198 = vadd.f32 %v1142, %v1176
      %v1199 = vadd.f32 %v1143, %v1196
      %s1200 = scalar_lea.vmem %s3, 24
      %v1201 = vld [vmem:[%s1200] sm:$0x7]
      %1202 = vrot.lane.b32.xlu0 %v870, 96
      %v1203 = vpop.permute.xlu0 %1202
      %1204 = vrot.lane.b32.xlu0 %v871, 96
      %v1205 = vpop.permute.xlu0 %1204
      %v1206 = vsel %vm693, %v1203, %v1205
      %v1208 = vsel %vm345, %v1201, 0
      %v1210 = vsel %vm349, %v1206, 0
      %v1212 = vsel %vm349, %v1205, 0
      %1214 = vmatpush.msra.mxu0 0.0
      %1215 = vmatpush.msra.mxu0 0.0
      %1216 = vmatpush.msra.mxu0 0.0
      %1217 = vmatpush.msra.mxu0 0.0
      %1218 = vmatpush.msra.mxu0 0.0
      %1219 = vmatpush.msra.mxu0 0.0
      %1220 = vmatpush.msra.mxu0 0.0
      %1221 = vmatpush.msra.mxu0 0.0
      %1222 = vmatpush.msra.mxu0 0.0
      %1223 = vmatpush.msra.mxu0 0.0
      %1224 = vmatpush.msra.mxu0 0.0
      %1225 = vmatpush.msra.mxu0 0.0
      %1226 = vmatpush.msra.mxu0 0.0
      %1227 = vmatpush.msra.mxu0 0.0
      %1228 = vmatpush.msra.mxu0 0.0
      %1229 = vmatpush.msra.mxu0 %v1210
      %1230 = vmatmul.f32.gmra.mxu0 %v1208
      %v1231 = vpop.f32.mrf.mxu0
      %v1232 = vadd.f32 0.0, %v1231
      %1233 = vdwg.mxu0
      %1234 = vmatpush.msra.mxu0 0.0
      %1235 = vmatpush.msra.mxu0 0.0
      %1236 = vmatpush.msra.mxu0 0.0
      %1237 = vmatpush.msra.mxu0 0.0
      %1238 = vmatpush.msra.mxu0 0.0
      %1239 = vmatpush.msra.mxu0 0.0
      %1240 = vmatpush.msra.mxu0 0.0
      %1241 = vmatpush.msra.mxu0 0.0
      %1242 = vmatpush.msra.mxu0 0.0
      %1243 = vmatpush.msra.mxu0 0.0
      %1244 = vmatpush.msra.mxu0 0.0
      %1245 = vmatpush.msra.mxu0 0.0
      %1246 = vmatpush.msra.mxu0 0.0
      %1247 = vmatpush.msra.mxu0 0.0
      %1248 = vmatpush.msra.mxu0 0.0
      %1249 = vmatpush.msra.mxu0 %v1212
      %1250 = vmatmul.f32.gmra.mxu0 %v1208
      %v1251 = vpop.f32.mrf.mxu0
      %v1252 = vadd.f32 0.0, %v1251
      %1253 = vdwg.mxu0
      %v1254 = vadd.f32 %v1198, %v1232
      %v1255 = vadd.f32 %v1199, %v1252
      %s1256 = scalar_lea.vmem %s3, 28
      %v1257 = vld [vmem:[%s1256] sm:$0x7]
      %1258 = vrot.lane.b32.xlu0 %v870, 95
      %v1259 = vpop.permute.xlu0 %1258
      %1260 = vrot.lane.b32.xlu0 %v871, 95
      %v1261 = vpop.permute.xlu0 %1260
      %v1262 = vsel %vm753, %v1259, %v1261
      %v1264 = vsel %vm345, %v1257, 0
      %v1266 = vsel %vm349, %v1262, 0
      %v1268 = vsel %vm349, %v1261, 0
      %1270 = vmatpush.msra.mxu0 0.0
      %1271 = vmatpush.msra.mxu0 0.0
      %1272 = vmatpush.msra.mxu0 0.0
      %1273 = vmatpush.msra.mxu0 0.0
      %1274 = vmatpush.msra.mxu0 0.0
      %1275 = vmatpush.msra.mxu0 0.0
      %1276 = vmatpush.msra.mxu0 0.0
      %1277 = vmatpush.msra.mxu0 0.0
      %1278 = vmatpush.msra.mxu0 0.0
      %1279 = vmatpush.msra.mxu0 0.0
      %1280 = vmatpush.msra.mxu0 0.0
      %1281 = vmatpush.msra.mxu0 0.0
      %1282 = vmatpush.msra.mxu0 0.0
      %1283 = vmatpush.msra.mxu0 0.0
      %1284 = vmatpush.msra.mxu0 0.0
      %1285 = vmatpush.msra.mxu0 %v1266
      %1286 = vmatmul.f32.gmra.mxu0 %v1264
      %v1287 = vpop.f32.mrf.mxu0
      %v1288 = vadd.f32 0.0, %v1287
      %1289 = vdwg.mxu0
      %1290 = vmatpush.msra.mxu0 0.0
      %1291 = vmatpush.msra.mxu0 0.0
      %1292 = vmatpush.msra.mxu0 0.0
      %1293 = vmatpush.msra.mxu0 0.0
      %1294 = vmatpush.msra.mxu0 0.0
      %1295 = vmatpush.msra.mxu0 0.0
      %1296 = vmatpush.msra.mxu0 0.0
      %1297 = vmatpush.msra.mxu0 0.0
      %1298 = vmatpush.msra.mxu0 0.0
      %1299 = vmatpush.msra.mxu0 0.0
      %1300 = vmatpush.msra.mxu0 0.0
      %1301 = vmatpush.msra.mxu0 0.0
      %1302 = vmatpush.msra.mxu0 0.0
      %1303 = vmatpush.msra.mxu0 0.0
      %1304 = vmatpush.msra.mxu0 0.0
      %1305 = vmatpush.msra.mxu0 %v1268
      %1306 = vmatmul.f32.gmra.mxu0 %v1264
      %v1307 = vpop.f32.mrf.mxu0
      %v1308 = vadd.f32 0.0, %v1307
      %1309 = vdwg.mxu0
      %v1310 = vadd.f32 %v1254, %v1288
      %v1311 = vadd.f32 %v1255, %v1308
      %s1312 = scalar_lea.vmem %s3, 32
      %v1313 = vld [vmem:[%s1312] sm:$0x7]
      %1314 = vrot.lane.b32.xlu0 %v870, 94
      %v1315 = vpop.permute.xlu0 %1314
      %1316 = vrot.lane.b32.xlu0 %v871, 94
      %v1317 = vpop.permute.xlu0 %1316
      %v1318 = vsel %vm813, %v1315, %v1317
      %v1320 = vsel %vm345, %v1313, 0
      %v1322 = vsel %vm349, %v1318, 0
      %v1324 = vsel %vm349, %v1317, 0
      %1326 = vmatpush.msra.mxu0 0.0
      %1327 = vmatpush.msra.mxu0 0.0
      %1328 = vmatpush.msra.mxu0 0.0
      %1329 = vmatpush.msra.mxu0 0.0
      %1330 = vmatpush.msra.mxu0 0.0
      %1331 = vmatpush.msra.mxu0 0.0
      %1332 = vmatpush.msra.mxu0 0.0
      %1333 = vmatpush.msra.mxu0 0.0
      %1334 = vmatpush.msra.mxu0 0.0
      %1335 = vmatpush.msra.mxu0 0.0
      %1336 = vmatpush.msra.mxu0 0.0
      %1337 = vmatpush.msra.mxu0 0.0
      %1338 = vmatpush.msra.mxu0 0.0
      %1339 = vmatpush.msra.mxu0 0.0
      %1340 = vmatpush.msra.mxu0 0.0
      %1341 = vmatpush.msra.mxu0 %v1322
      %1342 = vmatmul.f32.gmra.mxu0 %v1320
      %v1343 = vpop.f32.mrf.mxu0
      %v1344 = vadd.f32 0.0, %v1343
      %1345 = vdwg.mxu0
      %1346 = vmatpush.msra.mxu0 0.0
      %1347 = vmatpush.msra.mxu0 0.0
      %1348 = vmatpush.msra.mxu0 0.0
      %1349 = vmatpush.msra.mxu0 0.0
      %1350 = vmatpush.msra.mxu0 0.0
      %1351 = vmatpush.msra.mxu0 0.0
      %1352 = vmatpush.msra.mxu0 0.0
      %1353 = vmatpush.msra.mxu0 0.0
      %1354 = vmatpush.msra.mxu0 0.0
      %1355 = vmatpush.msra.mxu0 0.0
      %1356 = vmatpush.msra.mxu0 0.0
      %1357 = vmatpush.msra.mxu0 0.0
      %1358 = vmatpush.msra.mxu0 0.0
      %1359 = vmatpush.msra.mxu0 0.0
      %1360 = vmatpush.msra.mxu0 0.0
      %1361 = vmatpush.msra.mxu0 %v1324
      %1362 = vmatmul.f32.gmra.mxu0 %v1320
      %v1363 = vpop.f32.mrf.mxu0
      %v1364 = vadd.f32 0.0, %v1363
      %1365 = vdwg.mxu0
      %v1366 = vadd.f32 %v1310, %v1344
      %v1367 = vadd.f32 %v1311, %v1364
      %v1368 = vld [vmem:[%s4] sm:$0x7]
      %1370 = vset.pattern.permute.xlu0 0
      %1371 = vperm.xlu0 %1370, %v1368
      %v1372 = vpop.permute.xlu0 %1371
      %v1374 = vadd.f32 %v1366, %v1372
      %v1375 = vadd.f32 %v1367, %v1372
      %v1376 = vld [vmem:[%s5] sm:$0x7]
      %s1377 = scalar_lea.vmem %s5, 4
      %v1378 = vld [vmem:[%s1377] sm:$0x7]
      %1381 = vrot.lane.b32.xlu0 %v1374, 127
      %v1382 = vpop.permute.xlu0 %1381
      %1383 = vrot.lane.b32.xlu0 %v1375, 127
      %v1384 = vpop.permute.xlu0 %1383
      %v1385 = vsel %vm343, %v1382, %v1384
      %v1387 = vsel %vm345, %v1378, 0
      %v1389 = vsel %vm349, %v1385, 0
      %v1391 = vsel %vm349, %v1384, 0
      %1393 = vmatpush.msra.mxu0 0.0
      %1394 = vmatpush.msra.mxu0 0.0
      %1395 = vmatpush.msra.mxu0 0.0
      %1396 = vmatpush.msra.mxu0 0.0
      %1397 = vmatpush.msra.mxu0 0.0
      %1398 = vmatpush.msra.mxu0 0.0
      %1399 = vmatpush.msra.mxu0 0.0
      %1400 = vmatpush.msra.mxu0 0.0
      %1401 = vmatpush.msra.mxu0 0.0
      %1402 = vmatpush.msra.mxu0 0.0
      %1403 = vmatpush.msra.mxu0 0.0
      %1404 = vmatpush.msra.mxu0 0.0
      %1405 = vmatpush.msra.mxu0 0.0
      %1406 = vmatpush.msra.mxu0 0.0
      %1407 = vmatpush.msra.mxu0 0.0
      %1408 = vmatpush.msra.mxu0 %v1389
      %1409 = vmatmul.f32.gmra.mxu0 %v1387
      %v1410 = vpop.f32.mrf.mxu0
      %v1411 = vadd.f32 0.0, %v1410
      %1412 = vdwg.mxu0
      %1413 = vmatpush.msra.mxu0 0.0
      %1414 = vmatpush.msra.mxu0 0.0
      %1415 = vmatpush.msra.mxu0 0.0
      %1416 = vmatpush.msra.mxu0 0.0
      %1417 = vmatpush.msra.mxu0 0.0
      %1418 = vmatpush.msra.mxu0 0.0
      %1419 = vmatpush.msra.mxu0 0.0
      %1420 = vmatpush.msra.mxu0 0.0
      %1421 = vmatpush.msra.mxu0 0.0
      %1422 = vmatpush.msra.mxu0 0.0
      %1423 = vmatpush.msra.mxu0 0.0
      %1424 = vmatpush.msra.mxu0 0.0
      %1425 = vmatpush.msra.mxu0 0.0
      %1426 = vmatpush.msra.mxu0 0.0
      %1427 = vmatpush.msra.mxu0 0.0
      %1428 = vmatpush.msra.mxu0 %v1391
      %1429 = vmatmul.f32.gmra.mxu0 %v1387
      %v1430 = vpop.f32.mrf.mxu0
      %v1431 = vadd.f32 0.0, %v1430
      %1432 = vdwg.mxu0
      %v1434 = vsel %vm345, %v1376, 0
      %v1436 = vsel %vm349, %v1374, 0
      %v1438 = vsel %vm349, %v1375, 0
      %1440 = vmatpush.msra.mxu0 0.0
      %1441 = vmatpush.msra.mxu0 0.0
      %1442 = vmatpush.msra.mxu0 0.0
      %1443 = vmatpush.msra.mxu0 0.0
      %1444 = vmatpush.msra.mxu0 0.0
      %1445 = vmatpush.msra.mxu0 0.0
      %1446 = vmatpush.msra.mxu0 0.0
      %1447 = vmatpush.msra.mxu0 0.0
      %1448 = vmatpush.msra.mxu0 0.0
      %1449 = vmatpush.msra.mxu0 0.0
      %1450 = vmatpush.msra.mxu0 0.0
      %1451 = vmatpush.msra.mxu0 0.0
      %1452 = vmatpush.msra.mxu0 0.0
      %1453 = vmatpush.msra.mxu0 0.0
      %1454 = vmatpush.msra.mxu0 0.0
      %1455 = vmatpush.msra.mxu0 %v1436
      %1456 = vmatmul.f32.gmra.mxu0 %v1434
      %v1457 = vpop.f32.mrf.mxu0
      %v1458 = vadd.f32 %v1411, %v1457
      %1459 = vdwg.mxu0
      %1460 = vmatpush.msra.mxu0 0.0
      %1461 = vmatpush.msra.mxu0 0.0
      %1462 = vmatpush.msra.mxu0 0.0
      %1463 = vmatpush.msra.mxu0 0.0
      %1464 = vmatpush.msra.mxu0 0.0
      %1465 = vmatpush.msra.mxu0 0.0
      %1466 = vmatpush.msra.mxu0 0.0
      %1467 = vmatpush.msra.mxu0 0.0
      %1468 = vmatpush.msra.mxu0 0.0
      %1469 = vmatpush.msra.mxu0 0.0
      %1470 = vmatpush.msra.mxu0 0.0
      %1471 = vmatpush.msra.mxu0 0.0
      %1472 = vmatpush.msra.mxu0 0.0
      %1473 = vmatpush.msra.mxu0 0.0
      %1474 = vmatpush.msra.mxu0 0.0
      %1475 = vmatpush.msra.mxu0 %v1438
      %1476 = vmatmul.f32.gmra.mxu0 %v1434
      %v1477 = vpop.f32.mrf.mxu0
      %v1478 = vadd.f32 %v1431, %v1477
      %1479 = vdwg.mxu0
      %s1480 = scalar_lea.vmem %s5, 8
      %v1481 = vld [vmem:[%s1480] sm:$0x7]
      %1482 = vrot.lane.b32.xlu0 %v1374, 126
      %v1483 = vpop.permute.xlu0 %1482
      %1484 = vrot.lane.b32.xlu0 %v1375, 126
      %v1485 = vpop.permute.xlu0 %1484
      %v1486 = vsel %vm453, %v1483, %v1485
      %v1488 = vsel %vm345, %v1481, 0
      %v1490 = vsel %vm349, %v1486, 0
      %v1492 = vsel %vm349, %v1485, 0
      %1494 = vmatpush.msra.mxu0 0.0
      %1495 = vmatpush.msra.mxu0 0.0
      %1496 = vmatpush.msra.mxu0 0.0
      %1497 = vmatpush.msra.mxu0 0.0
      %1498 = vmatpush.msra.mxu0 0.0
      %1499 = vmatpush.msra.mxu0 0.0
      %1500 = vmatpush.msra.mxu0 0.0
      %1501 = vmatpush.msra.mxu0 0.0
      %1502 = vmatpush.msra.mxu0 0.0
      %1503 = vmatpush.msra.mxu0 0.0
      %1504 = vmatpush.msra.mxu0 0.0
      %1505 = vmatpush.msra.mxu0 0.0
      %1506 = vmatpush.msra.mxu0 0.0
      %1507 = vmatpush.msra.mxu0 0.0
      %1508 = vmatpush.msra.mxu0 0.0
      %1509 = vmatpush.msra.mxu0 %v1490
      %1510 = vmatmul.f32.gmra.mxu0 %v1488
      %v1511 = vpop.f32.mrf.mxu0
      %v1512 = vadd.f32 0.0, %v1511
      %1513 = vdwg.mxu0
      %1514 = vmatpush.msra.mxu0 0.0
      %1515 = vmatpush.msra.mxu0 0.0
      %1516 = vmatpush.msra.mxu0 0.0
      %1517 = vmatpush.msra.mxu0 0.0
      %1518 = vmatpush.msra.mxu0 0.0
      %1519 = vmatpush.msra.mxu0 0.0
      %1520 = vmatpush.msra.mxu0 0.0
      %1521 = vmatpush.msra.mxu0 0.0
      %1522 = vmatpush.msra.mxu0 0.0
      %1523 = vmatpush.msra.mxu0 0.0
      %1524 = vmatpush.msra.mxu0 0.0
      %1525 = vmatpush.msra.mxu0 0.0
      %1526 = vmatpush.msra.mxu0 0.0
      %1527 = vmatpush.msra.mxu0 0.0
      %1528 = vmatpush.msra.mxu0 0.0
      %1529 = vmatpush.msra.mxu0 %v1492
      %1530 = vmatmul.f32.gmra.mxu0 %v1488
      %v1531 = vpop.f32.mrf.mxu0
      %v1532 = vadd.f32 0.0, %v1531
      %1533 = vdwg.mxu0
      %v1534 = vadd.f32 %v1458, %v1512
      %v1535 = vadd.f32 %v1478, %v1532
      %s1536 = scalar_lea.vmem %s5, 12
      %v1537 = vld [vmem:[%s1536] sm:$0x7]
      %1538 = vrot.lane.b32.xlu0 %v1374, 112
      %v1539 = vpop.permute.xlu0 %1538
      %1540 = vrot.lane.b32.xlu0 %v1375, 112
      %v1541 = vpop.permute.xlu0 %1540
      %v1542 = vsel %vm513, %v1539, %v1541
      %v1544 = vsel %vm345, %v1537, 0
      %v1546 = vsel %vm349, %v1542, 0
      %v1548 = vsel %vm349, %v1541, 0
      %1550 = vmatpush.msra.mxu0 0.0
      %1551 = vmatpush.msra.mxu0 0.0
      %1552 = vmatpush.msra.mxu0 0.0
      %1553 = vmatpush.msra.mxu0 0.0
      %1554 = vmatpush.msra.mxu0 0.0
      %1555 = vmatpush.msra.mxu0 0.0
      %1556 = vmatpush.msra.mxu0 0.0
      %1557 = vmatpush.msra.mxu0 0.0
      %1558 = vmatpush.msra.mxu0 0.0
      %1559 = vmatpush.msra.mxu0 0.0
      %1560 = vmatpush.msra.mxu0 0.0
      %1561 = vmatpush.msra.mxu0 0.0
      %1562 = vmatpush.msra.mxu0 0.0
      %1563 = vmatpush.msra.mxu0 0.0
      %1564 = vmatpush.msra.mxu0 0.0
      %1565 = vmatpush.msra.mxu0 %v1546
      %1566 = vmatmul.f32.gmra.mxu0 %v1544
      %v1567 = vpop.f32.mrf.mxu0
      %v1568 = vadd.f32 0.0, %v1567
      %1569 = vdwg.mxu0
      %1570 = vmatpush.msra.mxu0 0.0
      %1571 = vmatpush.msra.mxu0 0.0
      %1572 = vmatpush.msra.mxu0 0.0
      %1573 = vmatpush.msra.mxu0 0.0
      %1574 = vmatpush.msra.mxu0 0.0
      %1575 = vmatpush.msra.mxu0 0.0
      %1576 = vmatpush.msra.mxu0 0.0
      %1577 = vmatpush.msra.mxu0 0.0
      %1578 = vmatpush.msra.mxu0 0.0
      %1579 = vmatpush.msra.mxu0 0.0
      %1580 = vmatpush.msra.mxu0 0.0
      %1581 = vmatpush.msra.mxu0 0.0
      %1582 = vmatpush.msra.mxu0 0.0
      %1583 = vmatpush.msra.mxu0 0.0
      %1584 = vmatpush.msra.mxu0 0.0
      %1585 = vmatpush.msra.mxu0 %v1548
      %1586 = vmatmul.f32.gmra.mxu0 %v1544
      %v1587 = vpop.f32.mrf.mxu0
      %v1588 = vadd.f32 0.0, %v1587
      %1589 = vdwg.mxu0
      %v1590 = vadd.f32 %v1534, %v1568
      %v1591 = vadd.f32 %v1535, %v1588
      %s1592 = scalar_lea.vmem %s5, 16
      %v1593 = vld [vmem:[%s1592] sm:$0x7]
      %1594 = vrot.lane.b32.xlu0 %v1374, 111
      %v1595 = vpop.permute.xlu0 %1594
      %1596 = vrot.lane.b32.xlu0 %v1375, 111
      %v1597 = vpop.permute.xlu0 %1596
      %v1598 = vsel %vm573, %v1595, %v1597
      %v1600 = vsel %vm345, %v1593, 0
      %v1602 = vsel %vm349, %v1598, 0
      %v1604 = vsel %vm349, %v1597, 0
      %1606 = vmatpush.msra.mxu0 0.0
      %1607 = vmatpush.msra.mxu0 0.0
      %1608 = vmatpush.msra.mxu0 0.0
      %1609 = vmatpush.msra.mxu0 0.0
      %1610 = vmatpush.msra.mxu0 0.0
      %1611 = vmatpush.msra.mxu0 0.0
      %1612 = vmatpush.msra.mxu0 0.0
      %1613 = vmatpush.msra.mxu0 0.0
      %1614 = vmatpush.msra.mxu0 0.0
      %1615 = vmatpush.msra.mxu0 0.0
      %1616 = vmatpush.msra.mxu0 0.0
      %1617 = vmatpush.msra.mxu0 0.0
      %1618 = vmatpush.msra.mxu0 0.0
      %1619 = vmatpush.msra.mxu0 0.0
      %1620 = vmatpush.msra.mxu0 0.0
      %1621 = vmatpush.msra.mxu0 %v1602
      %1622 = vmatmul.f32.gmra.mxu0 %v1600
      %v1623 = vpop.f32.mrf.mxu0
      %v1624 = vadd.f32 0.0, %v1623
      %1625 = vdwg.mxu0
      %1626 = vmatpush.msra.mxu0 0.0
      %1627 = vmatpush.msra.mxu0 0.0
      %1628 = vmatpush.msra.mxu0 0.0
      %1629 = vmatpush.msra.mxu0 0.0
      %1630 = vmatpush.msra.mxu0 0.0
      %1631 = vmatpush.msra.mxu0 0.0
      %1632 = vmatpush.msra.mxu0 0.0
      %1633 = vmatpush.msra.mxu0 0.0
      %1634 = vmatpush.msra.mxu0 0.0
      %1635 = vmatpush.msra.mxu0 0.0
      %1636 = vmatpush.msra.mxu0 0.0
      %1637 = vmatpush.msra.mxu0 0.0
      %1638 = vmatpush.msra.mxu0 0.0
      %1639 = vmatpush.msra.mxu0 0.0
      %1640 = vmatpush.msra.mxu0 0.0
      %1641 = vmatpush.msra.mxu0 %v1604
      %1642 = vmatmul.f32.gmra.mxu0 %v1600
      %v1643 = vpop.f32.mrf.mxu0
      %v1644 = vadd.f32 0.0, %v1643
      %1645 = vdwg.mxu0
      %v1646 = vadd.f32 %v1590, %v1624
      %v1647 = vadd.f32 %v1591, %v1644
      %s1648 = scalar_lea.vmem %s5, 20
      %v1649 = vld [vmem:[%s1648] sm:$0x7]
      %1650 = vrot.lane.b32.xlu0 %v1374, 110
      %v1651 = vpop.permute.xlu0 %1650
      %1652 = vrot.lane.b32.xlu0 %v1375, 110
      %v1653 = vpop.permute.xlu0 %1652
      %v1654 = vsel %vm633, %v1651, %v1653
      %v1656 = vsel %vm345, %v1649, 0
      %v1658 = vsel %vm349, %v1654, 0
      %v1660 = vsel %vm349, %v1653, 0
      %1662 = vmatpush.msra.mxu0 0.0
      %1663 = vmatpush.msra.mxu0 0.0
      %1664 = vmatpush.msra.mxu0 0.0
      %1665 = vmatpush.msra.mxu0 0.0
      %1666 = vmatpush.msra.mxu0 0.0
      %1667 = vmatpush.msra.mxu0 0.0
      %1668 = vmatpush.msra.mxu0 0.0
      %1669 = vmatpush.msra.mxu0 0.0
      %1670 = vmatpush.msra.mxu0 0.0
      %1671 = vmatpush.msra.mxu0 0.0
      %1672 = vmatpush.msra.mxu0 0.0
      %1673 = vmatpush.msra.mxu0 0.0
      %1674 = vmatpush.msra.mxu0 0.0
      %1675 = vmatpush.msra.mxu0 0.0
      %1676 = vmatpush.msra.mxu0 0.0
      %1677 = vmatpush.msra.mxu0 %v1658
      %1678 = vmatmul.f32.gmra.mxu0 %v1656
      %v1679 = vpop.f32.mrf.mxu0
      %v1680 = vadd.f32 0.0, %v1679
      %1681 = vdwg.mxu0
      %1682 = vmatpush.msra.mxu0 0.0
      %1683 = vmatpush.msra.mxu0 0.0
      %1684 = vmatpush.msra.mxu0 0.0
      %1685 = vmatpush.msra.mxu0 0.0
      %1686 = vmatpush.msra.mxu0 0.0
      %1687 = vmatpush.msra.mxu0 0.0
      %1688 = vmatpush.msra.mxu0 0.0
      %1689 = vmatpush.msra.mxu0 0.0
      %1690 = vmatpush.msra.mxu0 0.0
      %1691 = vmatpush.msra.mxu0 0.0
      %1692 = vmatpush.msra.mxu0 0.0
      %1693 = vmatpush.msra.mxu0 0.0
      %1694 = vmatpush.msra.mxu0 0.0
      %1695 = vmatpush.msra.mxu0 0.0
      %1696 = vmatpush.msra.mxu0 0.0
      %1697 = vmatpush.msra.mxu0 %v1660
      %1698 = vmatmul.f32.gmra.mxu0 %v1656
      %v1699 = vpop.f32.mrf.mxu0
      %v1700 = vadd.f32 0.0, %v1699
      %1701 = vdwg.mxu0
      %v1702 = vadd.f32 %v1646, %v1680
      %v1703 = vadd.f32 %v1647, %v1700
      %s1704 = scalar_lea.vmem %s5, 24
      %v1705 = vld [vmem:[%s1704] sm:$0x7]
      %1706 = vrot.lane.b32.xlu0 %v1374, 96
      %v1707 = vpop.permute.xlu0 %1706
      %1708 = vrot.lane.b32.xlu0 %v1375, 96
      %v1709 = vpop.permute.xlu0 %1708
      %v1710 = vsel %vm693, %v1707, %v1709
      %v1712 = vsel %vm345, %v1705, 0
      %v1714 = vsel %vm349, %v1710, 0
      %v1716 = vsel %vm349, %v1709, 0
      %1718 = vmatpush.msra.mxu0 0.0
      %1719 = vmatpush.msra.mxu0 0.0
      %1720 = vmatpush.msra.mxu0 0.0
      %1721 = vmatpush.msra.mxu0 0.0
      %1722 = vmatpush.msra.mxu0 0.0
      %1723 = vmatpush.msra.mxu0 0.0
      %1724 = vmatpush.msra.mxu0 0.0
      %1725 = vmatpush.msra.mxu0 0.0
      %1726 = vmatpush.msra.mxu0 0.0
      %1727 = vmatpush.msra.mxu0 0.0
      %1728 = vmatpush.msra.mxu0 0.0
      %1729 = vmatpush.msra.mxu0 0.0
      %1730 = vmatpush.msra.mxu0 0.0
      %1731 = vmatpush.msra.mxu0 0.0
      %1732 = vmatpush.msra.mxu0 0.0
      %1733 = vmatpush.msra.mxu0 %v1714
      %1734 = vmatmul.f32.gmra.mxu0 %v1712
      %v1735 = vpop.f32.mrf.mxu0
      %v1736 = vadd.f32 0.0, %v1735
      %1737 = vdwg.mxu0
      %1738 = vmatpush.msra.mxu0 0.0
      %1739 = vmatpush.msra.mxu0 0.0
      %1740 = vmatpush.msra.mxu0 0.0
      %1741 = vmatpush.msra.mxu0 0.0
      %1742 = vmatpush.msra.mxu0 0.0
      %1743 = vmatpush.msra.mxu0 0.0
      %1744 = vmatpush.msra.mxu0 0.0
      %1745 = vmatpush.msra.mxu0 0.0
      %1746 = vmatpush.msra.mxu0 0.0
      %1747 = vmatpush.msra.mxu0 0.0
      %1748 = vmatpush.msra.mxu0 0.0
      %1749 = vmatpush.msra.mxu0 0.0
      %1750 = vmatpush.msra.mxu0 0.0
      %1751 = vmatpush.msra.mxu0 0.0
      %1752 = vmatpush.msra.mxu0 0.0
      %1753 = vmatpush.msra.mxu0 %v1716
      %1754 = vmatmul.f32.gmra.mxu0 %v1712
      %v1755 = vpop.f32.mrf.mxu0
      %v1756 = vadd.f32 0.0, %v1755
      %1757 = vdwg.mxu0
      %v1758 = vadd.f32 %v1702, %v1736
      %v1759 = vadd.f32 %v1703, %v1756
      %s1760 = scalar_lea.vmem %s5, 28
      %v1761 = vld [vmem:[%s1760] sm:$0x7]
      %1762 = vrot.lane.b32.xlu0 %v1374, 95
      %v1763 = vpop.permute.xlu0 %1762
      %1764 = vrot.lane.b32.xlu0 %v1375, 95
      %v1765 = vpop.permute.xlu0 %1764
      %v1766 = vsel %vm753, %v1763, %v1765
      %v1768 = vsel %vm345, %v1761, 0
      %v1770 = vsel %vm349, %v1766, 0
      %v1772 = vsel %vm349, %v1765, 0
      %1774 = vmatpush.msra.mxu0 0.0
      %1775 = vmatpush.msra.mxu0 0.0
      %1776 = vmatpush.msra.mxu0 0.0
      %1777 = vmatpush.msra.mxu0 0.0
      %1778 = vmatpush.msra.mxu0 0.0
      %1779 = vmatpush.msra.mxu0 0.0
      %1780 = vmatpush.msra.mxu0 0.0
      %1781 = vmatpush.msra.mxu0 0.0
      %1782 = vmatpush.msra.mxu0 0.0
      %1783 = vmatpush.msra.mxu0 0.0
      %1784 = vmatpush.msra.mxu0 0.0
      %1785 = vmatpush.msra.mxu0 0.0
      %1786 = vmatpush.msra.mxu0 0.0
      %1787 = vmatpush.msra.mxu0 0.0
      %1788 = vmatpush.msra.mxu0 0.0
      %1789 = vmatpush.msra.mxu0 %v1770
      %1790 = vmatmul.f32.gmra.mxu0 %v1768
      %v1791 = vpop.f32.mrf.mxu0
      %v1792 = vadd.f32 0.0, %v1791
      %1793 = vdwg.mxu0
      %1794 = vmatpush.msra.mxu0 0.0
      %1795 = vmatpush.msra.mxu0 0.0
      %1796 = vmatpush.msra.mxu0 0.0
      %1797 = vmatpush.msra.mxu0 0.0
      %1798 = vmatpush.msra.mxu0 0.0
      %1799 = vmatpush.msra.mxu0 0.0
      %1800 = vmatpush.msra.mxu0 0.0
      %1801 = vmatpush.msra.mxu0 0.0
      %1802 = vmatpush.msra.mxu0 0.0
      %1803 = vmatpush.msra.mxu0 0.0
      %1804 = vmatpush.msra.mxu0 0.0
      %1805 = vmatpush.msra.mxu0 0.0
      %1806 = vmatpush.msra.mxu0 0.0
      %1807 = vmatpush.msra.mxu0 0.0
      %1808 = vmatpush.msra.mxu0 0.0
      %1809 = vmatpush.msra.mxu0 %v1772
      %1810 = vmatmul.f32.gmra.mxu0 %v1768
      %v1811 = vpop.f32.mrf.mxu0
      %v1812 = vadd.f32 0.0, %v1811
      %1813 = vdwg.mxu0
      %v1814 = vadd.f32 %v1758, %v1792
      %v1815 = vadd.f32 %v1759, %v1812
      %s1816 = scalar_lea.vmem %s5, 32
      %v1817 = vld [vmem:[%s1816] sm:$0x7]
      %1818 = vrot.lane.b32.xlu0 %v1374, 94
      %v1819 = vpop.permute.xlu0 %1818
      %1820 = vrot.lane.b32.xlu0 %v1375, 94
      %v1821 = vpop.permute.xlu0 %1820
      %v1822 = vsel %vm813, %v1819, %v1821
      %v1824 = vsel %vm345, %v1817, 0
      %v1826 = vsel %vm349, %v1822, 0
      %v1828 = vsel %vm349, %v1821, 0
      %1830 = vmatpush.msra.mxu0 0.0
      %1831 = vmatpush.msra.mxu0 0.0
      %1832 = vmatpush.msra.mxu0 0.0
      %1833 = vmatpush.msra.mxu0 0.0
      %1834 = vmatpush.msra.mxu0 0.0
      %1835 = vmatpush.msra.mxu0 0.0
      %1836 = vmatpush.msra.mxu0 0.0
      %1837 = vmatpush.msra.mxu0 0.0
      %1838 = vmatpush.msra.mxu0 0.0
      %1839 = vmatpush.msra.mxu0 0.0
      %1840 = vmatpush.msra.mxu0 0.0
      %1841 = vmatpush.msra.mxu0 0.0
      %1842 = vmatpush.msra.mxu0 0.0
      %1843 = vmatpush.msra.mxu0 0.0
      %1844 = vmatpush.msra.mxu0 0.0
      %1845 = vmatpush.msra.mxu0 %v1826
      %1846 = vmatmul.f32.gmra.mxu0 %v1824
      %v1847 = vpop.f32.mrf.mxu0
      %v1848 = vadd.f32 0.0, %v1847
      %1849 = vdwg.mxu0
      %1850 = vmatpush.msra.mxu0 0.0
      %1851 = vmatpush.msra.mxu0 0.0
      %1852 = vmatpush.msra.mxu0 0.0
      %1853 = vmatpush.msra.mxu0 0.0
      %1854 = vmatpush.msra.mxu0 0.0
      %1855 = vmatpush.msra.mxu0 0.0
      %1856 = vmatpush.msra.mxu0 0.0
      %1857 = vmatpush.msra.mxu0 0.0
      %1858 = vmatpush.msra.mxu0 0.0
      %1859 = vmatpush.msra.mxu0 0.0
      %1860 = vmatpush.msra.mxu0 0.0
      %1861 = vmatpush.msra.mxu0 0.0
      %1862 = vmatpush.msra.mxu0 0.0
      %1863 = vmatpush.msra.mxu0 0.0
      %1864 = vmatpush.msra.mxu0 0.0
      %1865 = vmatpush.msra.mxu0 %v1828
      %1866 = vmatmul.f32.gmra.mxu0 %v1824
      %v1867 = vpop.f32.mrf.mxu0
      %v1868 = vadd.f32 0.0, %v1867
      %1869 = vdwg.mxu0
      %v1870 = vadd.f32 %v1814, %v1848
      %v1871 = vadd.f32 %v1815, %v1868
      %v1872 = vld [vmem:[%s6] sm:$0x7]
      %1874 = vset.pattern.permute.xlu0 0
      %1875 = vperm.xlu0 %1874, %v1872
      %v1876 = vpop.permute.xlu0 %1875
      %v1878 = vadd.f32 %v1870, %v1876
      %v1879 = vadd.f32 %v1871, %v1876
      %v1880 = vmax.f32 %v1878, 0.0
      %v1881 = vmax.f32 %v1879, 0.0
      %v1882 = vld [vmem:[%s7] sm:$0x7]
      %s1883 = scalar_lea.vmem %s7, 4
      %v1884 = vld [vmem:[%s1883] sm:$0x7]
      %1886 = vrot.lane.b32.xlu0 %v1880, 127
      %v1887 = vpop.permute.xlu0 %1886
      %v1889 = vsel %vm345, %v1884, 0
      %v1891 = vsel %vm349, %v1887, 0
      %1893 = vmatpush.msra.mxu0 0.0
      %1894 = vmatpush.msra.mxu0 0.0
      %1895 = vmatpush.msra.mxu0 0.0
      %1896 = vmatpush.msra.mxu0 0.0
      %1897 = vmatpush.msra.mxu0 0.0
      %1898 = vmatpush.msra.mxu0 0.0
      %1899 = vmatpush.msra.mxu0 0.0
      %1900 = vmatpush.msra.mxu0 0.0
      %1901 = vmatpush.msra.mxu0 0.0
      %1902 = vmatpush.msra.mxu0 0.0
      %1903 = vmatpush.msra.mxu0 0.0
      %1904 = vmatpush.msra.mxu0 0.0
      %1905 = vmatpush.msra.mxu0 0.0
      %1906 = vmatpush.msra.mxu0 0.0
      %1907 = vmatpush.msra.mxu0 0.0
      %1908 = vmatpush.msra.mxu0 %v1891
      %1909 = vmatmul.f32.gmra.mxu0 %v1889
      %v1910 = vpop.f32.mrf.mxu0
      %v1911 = vadd.f32 0.0, %v1910
      %1912 = vdwg.mxu0
      %v1914 = vsel %vm345, %v1882, 0
      %v1916 = vsel %vm349, %v1880, 0
      %1918 = vmatpush.msra.mxu0 0.0
      %1919 = vmatpush.msra.mxu0 0.0
      %1920 = vmatpush.msra.mxu0 0.0
      %1921 = vmatpush.msra.mxu0 0.0
      %1922 = vmatpush.msra.mxu0 0.0
      %1923 = vmatpush.msra.mxu0 0.0
      %1924 = vmatpush.msra.mxu0 0.0
      %1925 = vmatpush.msra.mxu0 0.0
      %1926 = vmatpush.msra.mxu0 0.0
      %1927 = vmatpush.msra.mxu0 0.0
      %1928 = vmatpush.msra.mxu0 0.0
      %1929 = vmatpush.msra.mxu0 0.0
      %1930 = vmatpush.msra.mxu0 0.0
      %1931 = vmatpush.msra.mxu0 0.0
      %1932 = vmatpush.msra.mxu0 0.0
      %1933 = vmatpush.msra.mxu0 %v1916
      %1934 = vmatmul.f32.gmra.mxu0 %v1914
      %v1935 = vpop.f32.mrf.mxu0
      %v1936 = vadd.f32 %v1911, %v1935
      %1937 = vdwg.mxu0
      %s1938 = scalar_lea.vmem %s7, 8
      %v1939 = vld [vmem:[%s1938] sm:$0x7]
      %1940 = vrot.lane.b32.xlu0 %v1880, 126
      %v1941 = vpop.permute.xlu0 %1940
      %v1943 = vsel %vm345, %v1939, 0
      %v1945 = vsel %vm349, %v1941, 0
      %1947 = vmatpush.msra.mxu0 0.0
      %1948 = vmatpush.msra.mxu0 0.0
      %1949 = vmatpush.msra.mxu0 0.0
      %1950 = vmatpush.msra.mxu0 0.0
      %1951 = vmatpush.msra.mxu0 0.0
      %1952 = vmatpush.msra.mxu0 0.0
      %1953 = vmatpush.msra.mxu0 0.0
      %1954 = vmatpush.msra.mxu0 0.0
      %1955 = vmatpush.msra.mxu0 0.0
      %1956 = vmatpush.msra.mxu0 0.0
      %1957 = vmatpush.msra.mxu0 0.0
      %1958 = vmatpush.msra.mxu0 0.0
      %1959 = vmatpush.msra.mxu0 0.0
      %1960 = vmatpush.msra.mxu0 0.0
      %1961 = vmatpush.msra.mxu0 0.0
      %1962 = vmatpush.msra.mxu0 %v1945
      %1963 = vmatmul.f32.gmra.mxu0 %v1943
      %v1964 = vpop.f32.mrf.mxu0
      %v1965 = vadd.f32 0.0, %v1964
      %1966 = vdwg.mxu0
      %v1967 = vadd.f32 %v1936, %v1965
      %s1968 = scalar_lea.vmem %s7, 12
      %v1969 = vld [vmem:[%s1968] sm:$0x7]
      %1971 = vrot.lane.b32.xlu0 %v1880, 112
      %v1972 = vpop.permute.xlu0 %1971
      %1973 = vrot.lane.b32.xlu0 %v1881, 112
      %v1974 = vpop.permute.xlu0 %1973
      %v1975 = vsel %vm513, %v1972, %v1974
      %v1977 = vsel %vm345, %v1969, 0
      %v1979 = vsel %vm349, %v1975, 0
      %1981 = vmatpush.msra.mxu0 0.0
      %1982 = vmatpush.msra.mxu0 0.0
      %1983 = vmatpush.msra.mxu0 0.0
      %1984 = vmatpush.msra.mxu0 0.0
      %1985 = vmatpush.msra.mxu0 0.0
      %1986 = vmatpush.msra.mxu0 0.0
      %1987 = vmatpush.msra.mxu0 0.0
      %1988 = vmatpush.msra.mxu0 0.0
      %1989 = vmatpush.msra.mxu0 0.0
      %1990 = vmatpush.msra.mxu0 0.0
      %1991 = vmatpush.msra.mxu0 0.0
      %1992 = vmatpush.msra.mxu0 0.0
      %1993 = vmatpush.msra.mxu0 0.0
      %1994 = vmatpush.msra.mxu0 0.0
      %1995 = vmatpush.msra.mxu0 0.0
      %1996 = vmatpush.msra.mxu0 %v1979
      %1997 = vmatmul.f32.gmra.mxu0 %v1977
      %v1998 = vpop.f32.mrf.mxu0
      %v1999 = vadd.f32 0.0, %v1998
      %2000 = vdwg.mxu0
      %v2001 = vadd.f32 %v1967, %v1999
      %s2002 = scalar_lea.vmem %s7, 16
      %v2003 = vld [vmem:[%s2002] sm:$0x7]
      %2004 = vrot.lane.b32.xlu0 %v1880, 111
      %v2005 = vpop.permute.xlu0 %2004
      %2006 = vrot.lane.b32.xlu0 %v1881, 111
      %v2007 = vpop.permute.xlu0 %2006
      %v2008 = vsel %vm573, %v2005, %v2007
      %v2010 = vsel %vm345, %v2003, 0
      %v2012 = vsel %vm349, %v2008, 0
      %2014 = vmatpush.msra.mxu0 0.0
      %2015 = vmatpush.msra.mxu0 0.0
      %2016 = vmatpush.msra.mxu0 0.0
      %2017 = vmatpush.msra.mxu0 0.0
      %2018 = vmatpush.msra.mxu0 0.0
      %2019 = vmatpush.msra.mxu0 0.0
      %2020 = vmatpush.msra.mxu0 0.0
      %2021 = vmatpush.msra.mxu0 0.0
      %2022 = vmatpush.msra.mxu0 0.0
      %2023 = vmatpush.msra.mxu0 0.0
      %2024 = vmatpush.msra.mxu0 0.0
      %2025 = vmatpush.msra.mxu0 0.0
      %2026 = vmatpush.msra.mxu0 0.0
      %2027 = vmatpush.msra.mxu0 0.0
      %2028 = vmatpush.msra.mxu0 0.0
      %2029 = vmatpush.msra.mxu0 %v2012
      %2030 = vmatmul.f32.gmra.mxu0 %v2010
      %v2031 = vpop.f32.mrf.mxu0
      %v2032 = vadd.f32 0.0, %v2031
      %2033 = vdwg.mxu0
      %v2034 = vadd.f32 %v2001, %v2032
      %s2035 = scalar_lea.vmem %s7, 20
      %v2036 = vld [vmem:[%s2035] sm:$0x7]
      %2037 = vrot.lane.b32.xlu0 %v1880, 110
      %v2038 = vpop.permute.xlu0 %2037
      %2039 = vrot.lane.b32.xlu0 %v1881, 110
      %v2040 = vpop.permute.xlu0 %2039
      %v2041 = vsel %vm633, %v2038, %v2040
      %v2043 = vsel %vm345, %v2036, 0
      %v2045 = vsel %vm349, %v2041, 0
      %2047 = vmatpush.msra.mxu0 0.0
      %2048 = vmatpush.msra.mxu0 0.0
      %2049 = vmatpush.msra.mxu0 0.0
      %2050 = vmatpush.msra.mxu0 0.0
      %2051 = vmatpush.msra.mxu0 0.0
      %2052 = vmatpush.msra.mxu0 0.0
      %2053 = vmatpush.msra.mxu0 0.0
      %2054 = vmatpush.msra.mxu0 0.0
      %2055 = vmatpush.msra.mxu0 0.0
      %2056 = vmatpush.msra.mxu0 0.0
      %2057 = vmatpush.msra.mxu0 0.0
      %2058 = vmatpush.msra.mxu0 0.0
      %2059 = vmatpush.msra.mxu0 0.0
      %2060 = vmatpush.msra.mxu0 0.0
      %2061 = vmatpush.msra.mxu0 0.0
      %2062 = vmatpush.msra.mxu0 %v2045
      %2063 = vmatmul.f32.gmra.mxu0 %v2043
      %v2064 = vpop.f32.mrf.mxu0
      %v2065 = vadd.f32 0.0, %v2064
      %2066 = vdwg.mxu0
      %v2067 = vadd.f32 %v2034, %v2065
      %s2068 = scalar_lea.vmem %s7, 24
      %v2069 = vld [vmem:[%s2068] sm:$0x7]
      %2070 = vrot.lane.b32.xlu0 %v1880, 96
      %v2071 = vpop.permute.xlu0 %2070
      %2072 = vrot.lane.b32.xlu0 %v1881, 96
      %v2073 = vpop.permute.xlu0 %2072
      %v2074 = vsel %vm693, %v2071, %v2073
      %v2076 = vsel %vm345, %v2069, 0
      %v2078 = vsel %vm349, %v2074, 0
      %2080 = vmatpush.msra.mxu0 0.0
      %2081 = vmatpush.msra.mxu0 0.0
      %2082 = vmatpush.msra.mxu0 0.0
      %2083 = vmatpush.msra.mxu0 0.0
      %2084 = vmatpush.msra.mxu0 0.0
      %2085 = vmatpush.msra.mxu0 0.0
      %2086 = vmatpush.msra.mxu0 0.0
      %2087 = vmatpush.msra.mxu0 0.0
      %2088 = vmatpush.msra.mxu0 0.0
      %2089 = vmatpush.msra.mxu0 0.0
      %2090 = vmatpush.msra.mxu0 0.0
      %2091 = vmatpush.msra.mxu0 0.0
      %2092 = vmatpush.msra.mxu0 0.0
      %2093 = vmatpush.msra.mxu0 0.0
      %2094 = vmatpush.msra.mxu0 0.0
      %2095 = vmatpush.msra.mxu0 %v2078
      %2096 = vmatmul.f32.gmra.mxu0 %v2076
      %v2097 = vpop.f32.mrf.mxu0
      %v2098 = vadd.f32 0.0, %v2097
      %2099 = vdwg.mxu0
      %v2100 = vadd.f32 %v2067, %v2098
      %s2101 = scalar_lea.vmem %s7, 28
      %v2102 = vld [vmem:[%s2101] sm:$0x7]
      %2103 = vrot.lane.b32.xlu0 %v1880, 95
      %v2104 = vpop.permute.xlu0 %2103
      %2105 = vrot.lane.b32.xlu0 %v1881, 95
      %v2106 = vpop.permute.xlu0 %2105
      %v2107 = vsel %vm753, %v2104, %v2106
      %v2109 = vsel %vm345, %v2102, 0
      %v2111 = vsel %vm349, %v2107, 0
      %2113 = vmatpush.msra.mxu0 0.0
      %2114 = vmatpush.msra.mxu0 0.0
      %2115 = vmatpush.msra.mxu0 0.0
      %2116 = vmatpush.msra.mxu0 0.0
      %2117 = vmatpush.msra.mxu0 0.0
      %2118 = vmatpush.msra.mxu0 0.0
      %2119 = vmatpush.msra.mxu0 0.0
      %2120 = vmatpush.msra.mxu0 0.0
      %2121 = vmatpush.msra.mxu0 0.0
      %2122 = vmatpush.msra.mxu0 0.0
      %2123 = vmatpush.msra.mxu0 0.0
      %2124 = vmatpush.msra.mxu0 0.0
      %2125 = vmatpush.msra.mxu0 0.0
      %2126 = vmatpush.msra.mxu0 0.0
      %2127 = vmatpush.msra.mxu0 0.0
      %2128 = vmatpush.msra.mxu0 %v2111
      %2129 = vmatmul.f32.gmra.mxu0 %v2109
      %v2130 = vpop.f32.mrf.mxu0
      %v2131 = vadd.f32 0.0, %v2130
      %2132 = vdwg.mxu0
      %v2133 = vadd.f32 %v2100, %v2131
      %s2134 = scalar_lea.vmem %s7, 32
      %v2135 = vld [vmem:[%s2134] sm:$0x7]
      %2136 = vrot.lane.b32.xlu0 %v1880, 94
      %v2137 = vpop.permute.xlu0 %2136
      %2138 = vrot.lane.b32.xlu0 %v1881, 94
      %v2139 = vpop.permute.xlu0 %2138
      %v2140 = vsel %vm813, %v2137, %v2139
      %v2142 = vsel %vm345, %v2135, 0
      %v2144 = vsel %vm349, %v2140, 0
      %2146 = vmatpush.msra.mxu0 0.0
      %2147 = vmatpush.msra.mxu0 0.0
      %2148 = vmatpush.msra.mxu0 0.0
      %2149 = vmatpush.msra.mxu0 0.0
      %2150 = vmatpush.msra.mxu0 0.0
      %2151 = vmatpush.msra.mxu0 0.0
      %2152 = vmatpush.msra.mxu0 0.0
      %2153 = vmatpush.msra.mxu0 0.0
      %2154 = vmatpush.msra.mxu0 0.0
      %2155 = vmatpush.msra.mxu0 0.0
      %2156 = vmatpush.msra.mxu0 0.0
      %2157 = vmatpush.msra.mxu0 0.0
      %2158 = vmatpush.msra.mxu0 0.0
      %2159 = vmatpush.msra.mxu0 0.0
      %2160 = vmatpush.msra.mxu0 0.0
      %2161 = vmatpush.msra.mxu0 %v2144
      %2162 = vmatmul.f32.gmra.mxu0 %v2142
      %v2163 = vpop.f32.mrf.mxu0
      %v2164 = vadd.f32 0.0, %v2163
      %2165 = vdwg.mxu0
      %v2166 = vadd.f32 %v2133, %v2164
      %v2167 = vld [vmem:[%s8] sm:$0x7]
      %2169 = vset.pattern.permute.xlu0 0
      %2170 = vperm.xlu0 %2169, %v2167
      %v2171 = vpop.permute.xlu0 %2170
      %v2173 = vadd.f32 %v2166, %v2171
      %vm2174 = vcmask 976896
      %2175 = vst.msk [vmem:[%s330] sm:$0x7] %vm2174, %v2173
      %p2176 = scmp.lt.s32.totalorder %s20, 1
      %s2177 = scalar_select %p2176, %s20, 1
      %s2178 = smul.addr %s2177, 4
      %s2179 = scalar_lea.vmem %s9, %s2178
      // Predicated region
      $region57: #{tpu_custom_call.1} parent=55 // pred_check
        %p2180 = pneg %p232
      $region58: #{tpu_custom_call.1} parent=55 // pred_check_branch
        %2182 = sbr.rel (%p2180) target = $region60
      $region59: #{tpu_custom_call.1} parent=55 // pred_region
        _
      $region60: #{tpu_custom_call.1} parent=55 // pred_fallthru
        _
    $region56: #{tpu_custom_call.1} parent=5 // pred_fallthru
      _
    %p2183 = scmp.le.s32.totalorder 2, %s15
    // Predicated region
    $region61: #{tpu_custom_call.1} parent=5 // pred_check
      %p2184 = pneg %p2183
    $region62: #{tpu_custom_call.1} parent=5 // pred_check_branch
      %2186 = sbr.rel (%p2184) target = $region64
    $region63: #{tpu_custom_call.1} parent=5 // pred_region
      %s2187 = ssub.s32 %s15, 2
      // Predicated region
      $region65: #{tpu_custom_call.1} parent=63 // pred_check
        %p2188 = pneg %p238
      $region66: #{tpu_custom_call.1} parent=63 // pred_check_branch
        %2190 = sbr.rel (%p2188) target = $region68
      $region67: #{tpu_custom_call.1} parent=63 // pred_region
        %p2191 = scmp.lt.s32.totalorder %s21, 1
        %s2192 = scalar_select %p2191, %s21, 1
        %s2193 = smul.addr %s2192, 4
        %s2194 = scalar_lea.vmem %s9, %s2193
      $region68: #{tpu_custom_call.1} parent=63 // pred_fallthru
        _
    $region64: #{tpu_custom_call.1} parent=5 // pred_fallthru
      _
  $region6: #{tpu_custom_call.1} parent=0 // loop_footer
    %s19 = sadd.s32 1, %s15
  $region7: #{tpu_custom_call.1} parent=0 // loop_footer_branch
    %14 = sbr.rel target = $region3
  $region8: #{tpu_custom_call.1} parent=0 // loop_exit
    _

</llo_original>
